<compile_context>
chip_gen: v7x
topology: tpu7x:2x2x1
jax: 0.10.0
libtpu: 0.0.40
codegen_flags: <defaults>
</compile_context>

<pallas_src>
import functools

import jax
import jax.numpy as jnp
from jax import lax
from jax.experimental import pallas as pl
from jax.experimental.pallas import tpu as pltpu

# ---------------------------------------------------------------------------
# Config (TiMAEMambaEncoder(input_dim=4, num_heads=4, emb_size=32,
#   masking=True, cls_embed=True, expand_factor=2, ssm_state_size=32,
#   conv_size=4, bias=False, conv_bias=True, layer_norm_eps=1e-5,
#   mask_ratio=0.75))
# ---------------------------------------------------------------------------
INPUT_DIM = 4
NUM_HEADS = 4
EMB = 32
SSM_STATE = 32            # d_state
EXPAND = 2
D_CONV = 4
MASKING = True
CLS_EMBED = True
MASK_RATIO = 0.75
LN_EPS = 1e-5
RMS_EPS = 1e-5

HEADDIM = SSM_STATE // NUM_HEADS                      # 8
D_INNER = EXPAND * EMB                                # 64
D_SSM = D_INNER                                       # 64 (d_ssm=None -> d_inner)
NHEADS = D_SSM // HEADDIM                             # 8 internal Mamba2 heads
NGROUPS = 1
D_STATE = SSM_STATE                                   # 32
D_IN_PROJ = 2 * D_INNER + 2 * NGROUPS * D_STATE + NHEADS   # 200
CONV_DIM = D_SSM + 2 * NGROUPS * D_STATE              # 128
KCONV3 = 3 * INPUT_DIM                                # 12 (embedding im2col width)

# packed (1, C) parameter rows: one (N_PROWS, 128) array, every row starts at lane 0
(ROW_EMB_B, ROW_CLS, ROW_CONV_B, ROW_DT_B, ROW_A,
 ROW_D, ROW_RMS, ROW_LN_W, ROW_LN_B) = range(9)
N_PROWS = 9


# ---------------------------------------------------------------------------
# Fused kernel
# ---------------------------------------------------------------------------
def _sigmoid(x):
    return 1.0 / (1.0 + jnp.exp(-x))


def _softplus(x):
    return jnp.maximum(x, 0.0) + jnp.log(1.0 + jnp.exp(-jnp.abs(x)))


def fused_encoder_kernel(x_ref, p_ref, wemb_ref, wzdt_ref, wxbc_ref,
                         wconv_ref, wout_ref, out_ref, h_sc, xc_sc,
                         *, L, Lm, BB):
    f32 = jnp.float32
    bf16 = jnp.bfloat16
    N = BB * Lm                      # stacked rows handled by this grid step
    PAD = D_CONV - 1

    # ---- packed (1, C) parameter rows: a single DMA, fixed offsets ----
    P = p_ref[...]                                        # (N_PROWS, 128) f32
    emb_b = P[ROW_EMB_B:ROW_EMB_B + 1, 0:EMB]
    cls_row = P[ROW_CLS:ROW_CLS + 1, 0:EMB]
    conv_b = P[ROW_CONV_B:ROW_CONV_B + 1, :]
    dtb_row = P[ROW_DT_B:ROW_DT_B + 1, 0:NHEADS]
    a_row = P[ROW_A:ROW_A + 1, 0:NHEADS]                  # A = -exp(A_log)
    d_row = P[ROW_D:ROW_D + 1, 0:D_SSM]
    rms_row = P[ROW_RMS:ROW_RMS + 1, 0:D_SSM]
    lnw_row = P[ROW_LN_W:ROW_LN_W + 1, 0:EMB]
    lnb_row = P[ROW_LN_B:ROW_LN_B + 1, 0:EMB]

    # ---- TiMAEEmbedding: Conv1d(k=3, pad=1) as ONE im2col matmul / sample;
    #      results (and the cls row) are written straight into the h scratch.
    # TODO(synk): when porting real torch weights, emb_w must be the Conv1d
    # weight (E, Din, 3) permuted tap-major / channel-minor to (3*Din, E).
    wemb = wemb_ref[...]                                  # (12, EMB) bf16
    for i in range(BB):
        xi = x_ref[i].astype(bf16)                        # (L, 12)
        emb_i = jnp.dot(xi, wemb, preferred_element_type=f32) + emb_b
        h_sc[i * Lm:i * Lm + L, :] = emb_i
        if CLS_EMBED:
            h_sc[i * Lm + L:i * Lm + L + 1, :] = cls_row  # cls appended at END
    h = h_sc[...]                                         # (N, EMB), BB samples stacked
    hb = h.astype(bf16)

    # ---- Mamba2 in_proj (bias=False): [z | dt] fused in one 72-lane dot ----
    zdt = jnp.dot(hb, wzdt_ref[...], preferred_element_type=f32)    # (N, 72)
    z = zdt[:, 0:D_SSM]                                             # (N, 64)
    dt_raw = zdt[:, D_SSM:D_SSM + NHEADS]                           # (N, 8)
    xBC = jnp.dot(hb, wxbc_ref[...], preferred_element_type=f32)    # (N, 128)

    # per-row position inside its sample (for boundary masks; no integer div)
    r1 = lax.broadcasted_iota(jnp.int32, (N, 1), 0)
    pos1 = r1
    for i in range(1, BB):
        pos1 = pos1 - (r1 >= i * Lm).astype(jnp.int32) * Lm

    # ---- causal depthwise conv1d (K=D_CONV) + SiLU (per-sample causal) ----
    xc_sc[0:PAD, :] = jnp.zeros((PAD, CONV_DIM), f32)
    xc_sc[PAD:PAD + N, :] = xBC
    conv = conv_b                                                   # (1, 128)
    for delta in range(D_CONV):
        tap = wconv_ref[D_CONV - 1 - delta:D_CONV - delta, :]       # (1, 128)
        term = xc_sc[PAD - delta:PAD - delta + N, :] * tap          # (N, 128)
        if delta > 0:
            # zero contributions that would cross a sample boundary
            term = term * (pos1 >= delta).astype(f32)
        conv = conv + term
    xBC_act = conv * _sigmoid(conv)                                 # SiLU, (N, 128)

    xs = xBC_act[:, 0:D_SSM]                                        # (N, 64)
    Bm = xBC_act[:, D_SSM:D_SSM + D_STATE]                          # (N, 32)
    Cm = xBC_act[:, D_SSM + D_STATE:CONV_DIM]                       # (N, 32)

    # ---- selective SSM, exact SSD (matmul) formulation,
    #      block-diagonal causal mask so samples never mix ----
    dt_sp = _softplus(dt_raw + dtb_row)                             # (N, 8)

    r_t = lax.broadcasted_iota(jnp.int32, (N, N), 0)
    c_s = lax.broadcasted_iota(jnp.int32, (N, N), 1)
    causal = (c_s <= r_t) & (c_s >= r_t - pos1)                     # same sample & s <= t
    tril_f = causal.astype(f32)
    eye_f = (r_t == c_s).astype(f32)

    # per-sample inclusive cumsum over time via block-diagonal tril matmul
    cum = jnp.dot(tril_f, dt_sp, preferred_element_type=f32)        # (N, 8)
    acum = cum * a_row                                              # A_h * cum_t

    # G[t, s] = C_t . B_s  (shared across heads, ngroups=1) -> MXU "NT" dot
    G = lax.dot_general(Cm.astype(bf16), Bm.astype(bf16),
                        (((1,), (1,)), ((), ())),
                        preferred_element_type=f32)                 # (N, N)

    head_outs = []
    for hh in range(NHEADS):
        col = acum[:, hh:hh + 1]                                    # (N, 1): A*cum_t
        # (1, N) view of acum[:, hh] without a 2-D transpose (Mosaic-safe for
        # small unaligned shapes); negligible cost at this N.
        # TODO(synk): switch to one transpose / chunked segsum for long L.
        row = jnp.sum(eye_f * col, axis=0, keepdims=True)           # (1, N)
        diff = jnp.where(causal, col - row, -1e30)                  # <= 0 where kept
        Mh = (G * jnp.exp(diff)).astype(bf16)                       # (N, N)
        xdt_h = (xs[:, hh * HEADDIM:(hh + 1) * HEADDIM]
                 * dt_sp[:, hh:hh + 1]).astype(bf16)                # (N, HEADDIM)
        head_outs.append(jnp.dot(Mh, xdt_h, preferred_element_type=f32))
    y = jnp.concatenate(head_outs, axis=1) + d_row * xs             # (N, 64)

    # ---- gated RMSNorm: rmsnorm(y * silu(z)) * w ----
    g = y * (z * _sigmoid(z))
    ms = jnp.mean(g * g, axis=-1, keepdims=True)
    yn = g * lax.rsqrt(ms + RMS_EPS) * rms_row

    # ---- out_proj (bias=False) + final LayerNorm ----
    o = jnp.dot(yn.astype(bf16), wout_ref[...], preferred_element_type=f32)  # (N, 32)
    mu = jnp.mean(o, axis=-1, keepdims=True)
    oc = o - mu
    var = jnp.mean(oc * oc, axis=-1, keepdims=True)
    on = oc * lax.rsqrt(var + LN_EPS) * lnw_row + lnb_row           # (N, 32)

    for i in range(BB):
        out_ref[i] = on[i * Lm:(i + 1) * Lm, :]


# ---------------------------------------------------------------------------
# Parameters (deterministic synthetic init, shapes follow the torch module)
# ---------------------------------------------------------------------------
def init_params(key):
    ks = jax.random.split(key, 8)

    def rnd(k, shape, scale):
        return scale * jax.random.normal(k, shape, jnp.float32)

    return dict(
        emb_w=rnd(ks[0], (KCONV3, EMB), 0.2),             # Conv1d(k=3), tap-major
        emb_b=rnd(ks[1], (EMB,), 0.1),
        cls_token=jnp.zeros((1, 1, EMB), jnp.float32),    # torch init: zeros
        in_proj_w=rnd(ks[2], (EMB, D_IN_PROJ), 0.1),      # bias=False
        conv_w=rnd(ks[3], (D_CONV, CONV_DIM), 0.3),       # depthwise, (K, C)
        conv_b=rnd(ks[4], (CONV_DIM,), 0.1),              # conv_bias=True
        A_log=jnp.log(jax.random.uniform(ks[5], (NHEADS,), jnp.float32, 1.0, 16.0)),
        dt_bias=jax.random.uniform(ks[6], (NHEADS,), jnp.float32, -3.0, -1.0),
        D=jnp.ones((NHEADS,), jnp.float32),
        rms_w=jnp.ones((D_SSM,), jnp.float32),
        out_proj_w=rnd(ks[7], (D_SSM, EMB), 0.1),         # bias=False
        ln_w=jnp.ones((EMB,), jnp.float32),
        ln_b=jnp.zeros((EMB,), jnp.float32),
    )


# ---------------------------------------------------------------------------
# Forward pass
# ---------------------------------------------------------------------------
def random_masking(x, mask_ratio, key):
    # TODO(synk): torch.rand RNG stream is not reproducible in JAX; semantics
    # (per-sample argsort of uniform noise) are preserved with jax.random.
    N, L, _ = x.shape
    len_keep = int(L * (1 - mask_ratio))
    noise = jax.random.uniform(key, (N, L))
    ids_shuffle = jnp.argsort(noise, axis=1)
    ids_restore = jnp.argsort(ids_shuffle, axis=1)
    ids_keep = ids_shuffle[:, :len_keep]
    x_masked = jnp.take_along_axis(x, ids_keep[:, :, None], axis=1)
    mask = jnp.ones((N, L), jnp.float32)
    mask = mask.at[:, :len_keep].set(0.0)
    mask = jnp.take_along_axis(mask, ids_restore, axis=1)
    return x_masked, mask, ids_restore, ids_keep


def timae_mamba_encoder_forward(x, params, mask_key, *, samples_per_step=None):
    B, L, _ = x.shape
    Lm = L + 1 if CLS_EMBED else L

    # Samples per grid step.  Default: split the batch into 2 grid steps so
    # both v7x TensorCores get work; each step stacks bb*Lm rows on sublanes
    # (amortizes grid/DMA overhead and fills the MXU M dimension).
    bb = samples_per_step if samples_per_step is not None else max(1, -(-B // 2))
    n_steps = -(-B // bb)
    Bp = n_steps * bb
    xb = x if Bp == B else jnp.pad(x, ((0, Bp - B), (0, 0), (0, 0)))

    # Host-side im2col for the k=3 conv embedding: (Bp, L, 3*Din) = (Bp, L, 12)
    xpad = jnp.pad(xb, ((0, 0), (1, 1), (0, 0)))
    xcat = jnp.concatenate(
        [xpad[:, 0:L], xpad[:, 1:L + 1], xpad[:, 2:L + 2]], axis=-1)

    # Host-side weight prep (tiny, one-time).  Matmul weights go to bf16 (MXU
    # operands); accumulation stays f32 in-kernel.
    bf16 = jnp.bfloat16
    w_emb = params["emb_w"].astype(bf16)                                   # (12, 32)
    w_zdt = jnp.concatenate(
        [params["in_proj_w"][:, 0:D_SSM],
         params["in_proj_w"][:, D_SSM + CONV_DIM:D_IN_PROJ]], axis=1
    ).astype(bf16)                                                         # (32, 72)
    w_xbc = params["in_proj_w"][:, D_SSM:D_SSM + CONV_DIM].astype(bf16)    # (32, 128)
    w_out = params["out_proj_w"].astype(bf16)                              # (64, 32)

    def prow(v):
        v = v.reshape(1, -1).astype(jnp.float32)
        return jnp.pad(v, ((0, 0), (0, CONV_DIM - v.shape[1])))

    packed = jnp.concatenate([
        prow(params["emb_b"]),                    # row 0
        prow(params["cls_token"]),                # row 1
        prow(params["conv_b"]),                   # row 2
        prow(params["dt_bias"]),                  # row 3
        prow(-jnp.exp(params["A_log"])),          # row 4  (A)
        prow(jnp.repeat(params["D"], HEADDIM)),   # row 5  (D per channel)
        prow(params["rms_w"]),                    # row 6
        prow(params["ln_w"]),                     # row 7
        prow(params["ln_b"]),                     # row 8
    ], axis=0)                                                             # (9, 128)

    def wspec(shape):
        return pl.BlockSpec(shape, lambda b: (0,) * len(shape))

    hn = pl.pallas_call(
        functools.partial(fused_encoder_kernel, L=L, Lm=Lm, BB=bb),
        out_shape=jax.ShapeDtypeStruct((Bp, Lm, EMB), jnp.float32),
        grid=(n_steps,),
        in_specs=[
            pl.BlockSpec((bb, L, KCONV3), lambda b: (b, 0, 0)),  # im2col'ed input
            wspec((N_PROWS, CONV_DIM)),     # packed (1, C) parameter rows
            wspec((KCONV3, EMB)),           # embedding weight     (bf16)
            wspec((EMB, D_SSM + NHEADS)),   # in_proj -> [z | dt]  (bf16)
            wspec((EMB, CONV_DIM)),         # in_proj -> xBC       (bf16)
            wspec((D_CONV, CONV_DIM)),      # depthwise conv weight
            wspec((D_SSM, EMB)),            # out_proj             (bf16)
        ],
        out_specs=pl.BlockSpec((bb, Lm, EMB), lambda b: (b, 0, 0)),
        scratch_shapes=[
            pltpu.VMEM((bb * Lm, EMB), jnp.float32),                    # stacked h
            pltpu.VMEM((D_CONV - 1 + bb * Lm, CONV_DIM), jnp.float32),  # conv pad buf
        ],
        compiler_params=pltpu.CompilerParams(
            dimension_semantics=("parallel",)),
    )(xcat, packed, w_emb, w_zdt, w_xbc, params["conv_w"], w_out)

    hn = hn[:B]

    # ---- random masking AFTER the block (matches the reference module) ----
    if MASKING:
        if CLS_EMBED:
            cls_tok = hn[:, -1:, :]
            body = hn[:, :-1, :]
        else:
            body = hn
        x_masked, mask, ids_restore, ids_keep = random_masking(
            body, MASK_RATIO, mask_key)
        if CLS_EMBED:
            x_masked = jnp.concatenate([x_masked, cls_tok], axis=1)
        return x_masked, mask, ids_restore, ids_keep
    return hn


# ---------------------------------------------------------------------------
if __name__ == "__main__":
    B, L = 4, 8
    key = jax.random.PRNGKey(0)
    kx, kmask = jax.random.split(key)
    x = jax.random.normal(kx, (B, L, INPUT_DIM), jnp.float32)
    params = init_params(jax.random.PRNGKey(1))

    fwd = jax.jit(timae_mamba_encoder_forward)
    out, mask, ids_restore, ids_keep = fwd(x, params, kmask)
    out = jax.block_until_ready(out)
    jax.block_until_ready((mask, ids_restore, ids_keep))

    len_keep = int(L * (1 - MASK_RATIO))
    assert out.shape == (B, len_keep + 1, EMB), out.shape
    assert mask.shape == (B, L) and ids_restore.shape == (B, L)
    assert ids_keep.shape == (B, len_keep)
    assert bool(jnp.all(jnp.isfinite(out)))
    print("KERNEL_OK")
</pallas_src>

<mosaic_0001>
module attributes {stable_mosaic.version = 11 : i64} {
  func.func @fused_encoder_kernel(%arg0: i32, %arg1: memref<2x8x12xf32, #tpu.memory_space<vmem>>, %arg2: memref<9x128xf32, #tpu.memory_space<vmem>>, %arg3: memref<12x32xbf16, #tpu.memory_space<vmem>>, %arg4: memref<32x72xbf16, #tpu.memory_space<vmem>>, %arg5: memref<32x128xbf16, #tpu.memory_space<vmem>>, %arg6: memref<4x128xf32, #tpu.memory_space<vmem>>, %arg7: memref<64x32xbf16, #tpu.memory_space<vmem>>, %arg8: memref<2x9x32xf32, #tpu.memory_space<vmem>>, %arg9: memref<18x32xf32, #tpu.memory_space<vmem>>, %arg10: memref<21x128xf32, #tpu.memory_space<vmem>>) attributes {dimension_semantics = [#tpu.dimension_semantics<parallel>], iteration_bounds = array<i64: 2>, scalar_prefetch = 0 : i64, scratch_operands = 2 : i64, tpu.core_type = #tpu.core_type<tc>, window_params = [{transform_indices = @transform_0, window_bounds = array<i64: 2, 8, 12>}, {pipeline_mode = #tpu.pipeline_mode<synchronous>, transform_indices = @transform_1, window_bounds = array<i64: 9, 128>}, {pipeline_mode = #tpu.pipeline_mode<synchronous>, transform_indices = @transform_2, window_bounds = array<i64: 12, 32>}, {pipeline_mode = #tpu.pipeline_mode<synchronous>, transform_indices = @transform_3, window_bounds = array<i64: 32, 72>}, {pipeline_mode = #tpu.pipeline_mode<synchronous>, transform_indices = @transform_4, window_bounds = array<i64: 32, 128>}, {pipeline_mode = #tpu.pipeline_mode<synchronous>, transform_indices = @transform_5, window_bounds = array<i64: 4, 128>}, {pipeline_mode = #tpu.pipeline_mode<synchronous>, transform_indices = @transform_6, window_bounds = array<i64: 64, 32>}, {transform_indices = @transform_7, window_bounds = array<i64: 2, 9, 32>}]} {
    %c0 = arith.constant 0 : index
    %c0_0 = arith.constant 0 : index
    %0 = vector.load %arg2[%c0, %c0_0] : memref<9x128xf32, #tpu.memory_space<vmem>>, vector<9x128xf32>
    %1 = vector.extract_strided_slice %0 {offsets = [0, 0], sizes = [1, 32], strides = [1, 1]} : vector<9x128xf32> to vector<1x32xf32>
    %2 = vector.extract_strided_slice %0 {offsets = [1, 0], sizes = [1, 32], strides = [1, 1]} : vector<9x128xf32> to vector<1x32xf32>
    %3 = vector.extract_strided_slice %0 {offsets = [2, 0], sizes = [1, 128], strides = [1, 1]} : vector<9x128xf32> to vector<1x128xf32>
    %4 = vector.extract_strided_slice %0 {offsets = [3, 0], sizes = [1, 8], strides = [1, 1]} : vector<9x128xf32> to vector<1x8xf32>
    %5 = vector.extract_strided_slice %0 {offsets = [4, 0], sizes = [1, 8], strides = [1, 1]} : vector<9x128xf32> to vector<1x8xf32>
    %6 = vector.extract_strided_slice %0 {offsets = [5, 0], sizes = [1, 64], strides = [1, 1]} : vector<9x128xf32> to vector<1x64xf32>
    %7 = vector.extract_strided_slice %0 {offsets = [6, 0], sizes = [1, 64], strides = [1, 1]} : vector<9x128xf32> to vector<1x64xf32>
    %8 = vector.extract_strided_slice %0 {offsets = [7, 0], sizes = [1, 32], strides = [1, 1]} : vector<9x128xf32> to vector<1x32xf32>
    %9 = vector.extract_strided_slice %0 {offsets = [8, 0], sizes = [1, 32], strides = [1, 1]} : vector<9x128xf32> to vector<1x32xf32>
    %c0_1 = arith.constant 0 : index
    %c0_2 = arith.constant 0 : index
    %10 = vector.load %arg3[%c0_1, %c0_2] : memref<12x32xbf16, #tpu.memory_space<vmem>>, vector<12x32xbf16>
    %c0_3 = arith.constant 0 : index
    %c0_4 = arith.constant 0 : index
    %c0_5 = arith.constant 0 : index
    %11 = vector.load %arg1[%c0_3, %c0_4, %c0_5] : memref<2x8x12xf32, #tpu.memory_space<vmem>>, vector<1x8x12xf32>
    %12 = vector.shape_cast %11 : vector<1x8x12xf32> to vector<8x12xf32>
    %13 = arith.truncf %12 : vector<8x12xf32> to vector<8x12xbf16>
    %cst = arith.constant dense<0.000000e+00> : vector<8x32xf32>
    %14 = tpu.matmul %13, %10, %cst {dimension_numbers = #tpu.dot_dimension_numbers<[1], [0], [0], [1], [0, 0, 1, 1], [], []>} : vector<8x12xbf16>, vector<12x32xbf16>, vector<8x32xf32> -> vector<8x32xf32>
    %15 = vector.broadcast %1 : vector<1x32xf32> to vector<8x32xf32>
    %16 = arith.addf %14, %15 : vector<8x32xf32>
    %c0_6 = arith.constant 0 : index
    %c0_7 = arith.constant 0 : index
    %17 = vector.load %arg9[%c0_6, %c0_7] : memref<18x32xf32, #tpu.memory_space<vmem>>, vector<8x32xf32>
    tpu.vector_store %arg9[%c0_6, %c0_7], %16 {strides = array<i32>} : memref<18x32xf32, #tpu.memory_space<vmem>>, vector<8x32xf32>,
    %c8 = arith.constant 8 : index
    %c0_8 = arith.constant 0 : index
    %18 = vector.load %arg9[%c8, %c0_8] : memref<18x32xf32, #tpu.memory_space<vmem>>, vector<1x32xf32>
    tpu.vector_store %arg9[%c8, %c0_8], %2 {strides = array<i32>} : memref<18x32xf32, #tpu.memory_space<vmem>>, vector<1x32xf32>,
    %c1 = arith.constant 1 : index
    %c0_9 = arith.constant 0 : index
    %c0_10 = arith.constant 0 : index
    %19 = vector.load %arg1[%c1, %c0_9, %c0_10] : memref<2x8x12xf32, #tpu.memory_space<vmem>>, vector<1x8x12xf32>
    %20 = vector.shape_cast %19 : vector<1x8x12xf32> to vector<8x12xf32>
    %21 = arith.truncf %20 : vector<8x12xf32> to vector<8x12xbf16>
    %cst_11 = arith.constant dense<0.000000e+00> : vector<8x32xf32>
    %22 = tpu.matmul %21, %10, %cst_11 {dimension_numbers = #tpu.dot_dimension_numbers<[1], [0], [0], [1], [0, 0, 1, 1], [], []>} : vector<8x12xbf16>, vector<12x32xbf16>, vector<8x32xf32> -> vector<8x32xf32>
    %23 = vector.broadcast %1 : vector<1x32xf32> to vector<8x32xf32>
    %24 = arith.addf %22, %23 : vector<8x32xf32>
    %c9 = arith.constant 9 : index
    %c0_12 = arith.constant 0 : index
    %25 = vector.load %arg9[%c9, %c0_12] : memref<18x32xf32, #tpu.memory_space<vmem>>, vector<8x32xf32>
    tpu.vector_store %arg9[%c9, %c0_12], %24 {strides = array<i32>} : memref<18x32xf32, #tpu.memory_space<vmem>>, vector<8x32xf32>,
    %c17 = arith.constant 17 : index
    %c0_13 = arith.constant 0 : index
    %26 = vector.load %arg9[%c17, %c0_13] : memref<18x32xf32, #tpu.memory_space<vmem>>, vector<1x32xf32>
    tpu.vector_store %arg9[%c17, %c0_13], %2 {strides = array<i32>} : memref<18x32xf32, #tpu.memory_space<vmem>>, vector<1x32xf32>,
    %c0_14 = arith.constant 0 : index
    %c0_15 = arith.constant 0 : index
    %27 = vector.load %arg9[%c0_14, %c0_15] : memref<18x32xf32, #tpu.memory_space<vmem>>, vector<18x32xf32>
    %28 = arith.truncf %27 : vector<18x32xf32> to vector<18x32xbf16>
    %c0_16 = arith.constant 0 : index
    %c0_17 = arith.constant 0 : index
    %29 = vector.load %arg4[%c0_16, %c0_17] : memref<32x72xbf16, #tpu.memory_space<vmem>>, vector<32x72xbf16>
    %cst_18 = arith.constant dense<0.000000e+00> : vector<18x72xf32>
    %30 = tpu.matmul %28, %29, %cst_18 {dimension_numbers = #tpu.dot_dimension_numbers<[1], [0], [0], [1], [0, 0, 1, 1], [], []>} : vector<18x32xbf16>, vector<32x72xbf16>, vector<18x72xf32> -> vector<18x72xf32>
    %31 = vector.extract_strided_slice %30 {offsets = [0, 0], sizes = [18, 64], strides = [1, 1]} : vector<18x72xf32> to vector<18x64xf32>
    %32 = vector.extract_strided_slice %30 {offsets = [0, 64], sizes = [18, 8], strides = [1, 1]} : vector<18x72xf32> to vector<18x8xf32>
    %c0_19 = arith.constant 0 : index
    %c0_20 = arith.constant 0 : index
    %33 = vector.load %arg5[%c0_19, %c0_20] : memref<32x128xbf16, #tpu.memory_space<vmem>>, vector<32x128xbf16>
    %cst_21 = arith.constant dense<0.000000e+00> : vector<18x128xf32>
    %34 = tpu.matmul %28, %33, %cst_21 {dimension_numbers = #tpu.dot_dimension_numbers<[1], [0], [0], [1], [0, 0, 1, 1], [], []>} : vector<18x32xbf16>, vector<32x128xbf16>, vector<18x128xf32> -> vector<18x128xf32>
    %35 = tpu.iota {dimensions = array<i32: 0>} : vector<18x1xi32>
    %c9_i32 = arith.constant 9 : i32
    %36 = vector.broadcast %c9_i32 : i32 to vector<18x1xi32>
    %37 = arith.cmpi sge, %35, %36 : vector<18x1xi32>
    %38 = arith.extui %37 : vector<18x1xi1> to vector<18x1xi32>
    %c9_i32_22 = arith.constant 9 : i32
    %39 = vector.broadcast %c9_i32_22 : i32 to vector<18x1xi32>
    %40 = arith.muli %38, %39 : vector<18x1xi32>
    %41 = arith.subi %35, %40 : vector<18x1xi32>
    %cst_23 = arith.constant 0.000000e+00 : f32
    %42 = vector.broadcast %cst_23 : f32 to vector<3x128xf32>
    %c0_24 = arith.constant 0 : index
    %c0_25 = arith.constant 0 : index
    %43 = vector.load %arg10[%c0_24, %c0_25] : memref<21x128xf32, #tpu.memory_space<vmem>>, vector<3x128xf32>
    tpu.vector_store %arg10[%c0_24, %c0_25], %42 {strides = array<i32>} : memref<21x128xf32, #tpu.memory_space<vmem>>, vector<3x128xf32>,
    %c3 = arith.constant 3 : index
    %c0_26 = arith.constant 0 : index
    %44 = vector.load %arg10[%c3, %c0_26] : memref<21x128xf32, #tpu.memory_space<vmem>>, vector<18x128xf32>
    tpu.vector_store %arg10[%c3, %c0_26], %34 {strides = array<i32>} : memref<21x128xf32, #tpu.memory_space<vmem>>, vector<18x128xf32>,
    %c3_27 = arith.constant 3 : index
    %c0_28 = arith.constant 0 : index
    %45 = vector.load %arg6[%c3_27, %c0_28] : memref<4x128xf32, #tpu.memory_space<vmem>>, vector<1x128xf32>
    %c3_29 = arith.constant 3 : index
    %c0_30 = arith.constant 0 : index
    %46 = vector.load %arg10[%c3_29, %c0_30] : memref<21x128xf32, #tpu.memory_space<vmem>>, vector<18x128xf32>
    %47 = vector.broadcast %45 : vector<1x128xf32> to vector<18x128xf32>
    %48 = arith.mulf %46, %47 : vector<18x128xf32>
    %49 = vector.broadcast %3 : vector<1x128xf32> to vector<18x128xf32>
    %50 = arith.addf %49, %48 : vector<18x128xf32>
    %c2 = arith.constant 2 : index
    %c0_31 = arith.constant 0 : index
    %51 = vector.load %arg6[%c2, %c0_31] : memref<4x128xf32, #tpu.memory_space<vmem>>, vector<1x128xf32>
    %c2_32 = arith.constant 2 : index
    %c0_33 = arith.constant 0 : index
    %52 = vector.load %arg10[%c2_32, %c0_33] : memref<21x128xf32, #tpu.memory_space<vmem>>, vector<18x128xf32>
    %53 = vector.broadcast %51 : vector<1x128xf32> to vector<18x128xf32>
    %54 = arith.mulf %52, %53 : vector<18x128xf32>
    %c1_i32 = arith.constant 1 : i32
    %55 = vector.broadcast %c1_i32 : i32 to vector<18x1xi32>
    %56 = arith.cmpi sge, %41, %55 : vector<18x1xi32>
    %57 = arith.extui %56 : vector<18x1xi1> to vector<18x1xi32>
    %58 = arith.sitofp %57 : vector<18x1xi32> to vector<18x1xf32>
    %59 = vector.broadcast %58 : vector<18x1xf32> to vector<18x128xf32>
    %60 = arith.mulf %54, %59 : vector<18x128xf32>
    %61 = arith.addf %50, %60 : vector<18x128xf32>
    %c1_34 = arith.constant 1 : index
    %c0_35 = arith.constant 0 : index
    %62 = vector.load %arg6[%c1_34, %c0_35] : memref<4x128xf32, #tpu.memory_space<vmem>>, vector<1x128xf32>
    %c1_36 = arith.constant 1 : index
    %c0_37 = arith.constant 0 : index
    %63 = vector.load %arg10[%c1_36, %c0_37] : memref<21x128xf32, #tpu.memory_space<vmem>>, vector<18x128xf32>
    %64 = vector.broadcast %62 : vector<1x128xf32> to vector<18x128xf32>
    %65 = arith.mulf %63, %64 : vector<18x128xf32>
    %c2_i32 = arith.constant 2 : i32
    %66 = vector.broadcast %c2_i32 : i32 to vector<18x1xi32>
    %67 = arith.cmpi sge, %41, %66 : vector<18x1xi32>
    %68 = arith.extui %67 : vector<18x1xi1> to vector<18x1xi32>
    %69 = arith.sitofp %68 : vector<18x1xi32> to vector<18x1xf32>
    %70 = vector.broadcast %69 : vector<18x1xf32> to vector<18x128xf32>
    %71 = arith.mulf %65, %70 : vector<18x128xf32>
    %72 = arith.addf %61, %71 : vector<18x128xf32>
    %c0_38 = arith.constant 0 : index
    %c0_39 = arith.constant 0 : index
    %73 = vector.load %arg6[%c0_38, %c0_39] : memref<4x128xf32, #tpu.memory_space<vmem>>, vector<1x128xf32>
    %c0_40 = arith.constant 0 : index
    %c0_41 = arith.constant 0 : index
    %74 = vector.load %arg10[%c0_40, %c0_41] : memref<21x128xf32, #tpu.memory_space<vmem>>, vector<18x128xf32>
    %75 = vector.broadcast %73 : vector<1x128xf32> to vector<18x128xf32>
    %76 = arith.mulf %74, %75 : vector<18x128xf32>
    %c3_i32 = arith.constant 3 : i32
    %77 = vector.broadcast %c3_i32 : i32 to vector<18x1xi32>
    %78 = arith.cmpi sge, %41, %77 : vector<18x1xi32>
    %79 = arith.extui %78 : vector<18x1xi1> to vector<18x1xi32>
    %80 = arith.sitofp %79 : vector<18x1xi32> to vector<18x1xf32>
    %81 = vector.broadcast %80 : vector<18x1xf32> to vector<18x128xf32>
    %82 = arith.mulf %76, %81 : vector<18x128xf32>
    %83 = arith.addf %72, %82 : vector<18x128xf32>
    %cst_42 = arith.constant 0.000000e+00 : f32
    %84 = vector.broadcast %cst_42 : f32 to vector<18x128xf32>
    %85 = arith.subf %84, %83 : vector<18x128xf32>
    %86 = math.exp %85 : vector<18x128xf32>
    %cst_43 = arith.constant 1.000000e+00 : f32
    %87 = vector.broadcast %cst_43 : f32 to vector<18x128xf32>
    %88 = arith.addf %87, %86 : vector<18x128xf32>
    %cst_44 = arith.constant 1.000000e+00 : f32
    %89 = vector.broadcast %cst_44 : f32 to vector<18x128xf32>
    %90 = arith.divf %89, %88 : vector<18x128xf32>
    %91 = arith.mulf %83, %90 : vector<18x128xf32>
    %92 = vector.extract_strided_slice %91 {offsets = [0, 0], sizes = [18, 64], strides = [1, 1]} : vector<18x128xf32> to vector<18x64xf32>
    %93 = vector.extract_strided_slice %91 {offsets = [0, 64], sizes = [18, 32], strides = [1, 1]} : vector<18x128xf32> to vector<18x32xf32>
    %94 = vector.extract_strided_slice %91 {offsets = [0, 96], sizes = [18, 32], strides = [1, 1]} : vector<18x128xf32> to vector<18x32xf32>
    %95 = vector.broadcast %4 : vector<1x8xf32> to vector<18x8xf32>
    %96 = arith.addf %32, %95 : vector<18x8xf32>
    %cst_45 = arith.constant 0.000000e+00 : f32
    %97 = vector.broadcast %cst_45 : f32 to vector<18x8xf32>
    %98 = arith.maximumf %96, %97 : vector<18x8xf32>
    %99 = math.absf %96 : vector<18x8xf32>
    %cst_46 = arith.constant 0.000000e+00 : f32
    %100 = vector.broadcast %cst_46 : f32 to vector<18x8xf32>
    %101 = arith.subf %100, %99 : vector<18x8xf32>
    %102 = math.exp %101 : vector<18x8xf32>
    %cst_47 = arith.constant 1.000000e+00 : f32
    %103 = vector.broadcast %cst_47 : f32 to vector<18x8xf32>
    %104 = arith.addf %103, %102 : vector<18x8xf32>
    %105 = math.log %104 : vector<18x8xf32>
    %106 = arith.addf %98, %105 : vector<18x8xf32>
    %107 = tpu.iota {dimensions = array<i32: 0>} : vector<18x18xi32>
    %108 = tpu.iota {dimensions = array<i32: 1>} : vector<18x18xi32>
    %109 = arith.cmpi sle, %108, %107 : vector<18x18xi32>
    %110 = vector.broadcast %41 : vector<18x1xi32> to vector<18x18xi32>
    %111 = arith.subi %107, %110 : vector<18x18xi32>
    %112 = arith.cmpi sge, %108, %111 : vector<18x18xi32>
    %113 = arith.andi %109, %112 : vector<18x18xi1>
    %114 = arith.extui %113 : vector<18x18xi1> to vector<18x18xi32>
    %115 = arith.sitofp %114 : vector<18x18xi32> to vector<18x18xf32>
    %116 = arith.cmpi eq, %107, %108 : vector<18x18xi32>
    %117 = arith.extui %116 : vector<18x18xi1> to vector<18x18xi32>
    %118 = arith.sitofp %117 : vector<18x18xi32> to vector<18x18xf32>
    %cst_48 = arith.constant dense<0.000000e+00> : vector<18x8xf32>
    %119 = tpu.matmul %115, %106, %cst_48 {dimension_numbers = #tpu.dot_dimension_numbers<[1], [0], [0], [1], [0, 0, 1, 1], [], []>} : vector<18x18xf32>, vector<18x8xf32>, vector<18x8xf32> -> vector<18x8xf32>
    %120 = vector.broadcast %5 : vector<1x8xf32> to vector<18x8xf32>
    %121 = arith.mulf %119, %120 : vector<18x8xf32>
    %122 = arith.truncf %94 : vector<18x32xf32> to vector<18x32xbf16>
    %123 = arith.truncf %93 : vector<18x32xf32> to vector<18x32xbf16>
    %cst_49 = arith.constant dense<0.000000e+00> : vector<18x18xf32>
    %124 = tpu.matmul %122, %123, %cst_49 {dimension_numbers = #tpu.dot_dimension_numbers<[1], [1], [0], [0], [0, 0, 1, 0], [], []>} : vector<18x32xbf16>, vector<18x32xbf16>, vector<18x18xf32> -> vector<18x18xf32>
    %125 = vector.extract_strided_slice %121 {offsets = [0, 0], sizes = [18, 1], strides = [1, 1]} : vector<18x8xf32> to vector<18x1xf32>
    %126 = vector.broadcast %125 : vector<18x1xf32> to vector<18x18xf32>
    %127 = arith.mulf %118, %126 : vector<18x18xf32>
    %cst_50 = arith.constant dense<0.000000e+00> : vector<18xf32>
    %128 = vector.multi_reduction <add>, %127, %cst_50 [0] : vector<18x18xf32> to vector<18xf32>
    %129 = vector.shape_cast %128 : vector<18xf32> to vector<1x18xf32>
    %130 = vector.broadcast %125 : vector<18x1xf32> to vector<18x18xf32>
    %131 = vector.broadcast %129 : vector<1x18xf32> to vector<18x18xf32>
    %132 = arith.subf %130, %131 : vector<18x18xf32>
    %cst_51 = arith.constant -1.000000e+30 : f32
    %133 = vector.broadcast %cst_51 : f32 to vector<18x18xf32>
    %134 = arith.select %113, %132, %133 : vector<18x18xi1>, vector<18x18xf32>
    %135 = math.exp %134 : vector<18x18xf32>
    %136 = arith.mulf %124, %135 : vector<18x18xf32>
    %137 = arith.truncf %136 : vector<18x18xf32> to vector<18x18xbf16>
    %138 = vector.extract_strided_slice %92 {offsets = [0, 0], sizes = [18, 8], strides = [1, 1]} : vector<18x64xf32> to vector<18x8xf32>
    %139 = vector.extract_strided_slice %106 {offsets = [0, 0], sizes = [18, 1], strides = [1, 1]} : vector<18x8xf32> to vector<18x1xf32>
    %140 = vector.broadcast %139 : vector<18x1xf32> to vector<18x8xf32>
    %141 = arith.mulf %138, %140 : vector<18x8xf32>
    %142 = arith.truncf %141 : vector<18x8xf32> to vector<18x8xbf16>
    %cst_52 = arith.constant dense<0.000000e+00> : vector<18x8xf32>
    %143 = tpu.matmul %137, %142, %cst_52 {dimension_numbers = #tpu.dot_dimension_numbers<[1], [0], [0], [1], [0, 0, 1, 1], [], []>} : vector<18x18xbf16>, vector<18x8xbf16>, vector<18x8xf32> -> vector<18x8xf32>
    %144 = vector.extract_strided_slice %121 {offsets = [0, 1], sizes = [18, 1], strides = [1, 1]} : vector<18x8xf32> to vector<18x1xf32>
    %145 = vector.broadcast %144 : vector<18x1xf32> to vector<18x18xf32>
    %146 = arith.mulf %118, %145 : vector<18x18xf32>
    %cst_53 = arith.constant dense<0.000000e+00> : vector<18xf32>
    %147 = vector.multi_reduction <add>, %146, %cst_53 [0] : vector<18x18xf32> to vector<18xf32>
    %148 = vector.shape_cast %147 : vector<18xf32> to vector<1x18xf32>
    %149 = vector.broadcast %144 : vector<18x1xf32> to vector<18x18xf32>
    %150 = vector.broadcast %148 : vector<1x18xf32> to vector<18x18xf32>
    %151 = arith.subf %149, %150 : vector<18x18xf32>
    %cst_54 = arith.constant -1.000000e+30 : f32
    %152 = vector.broadcast %cst_54 : f32 to vector<18x18xf32>
    %153 = arith.select %113, %151, %152 : vector<18x18xi1>, vector<18x18xf32>
    %154 = math.exp %153 : vector<18x18xf32>
    %155 = arith.mulf %124, %154 : vector<18x18xf32>
    %156 = arith.truncf %155 : vector<18x18xf32> to vector<18x18xbf16>
    %157 = vector.extract_strided_slice %92 {offsets = [0, 8], sizes = [18, 8], strides = [1, 1]} : vector<18x64xf32> to vector<18x8xf32>
    %158 = vector.extract_strided_slice %106 {offsets = [0, 1], sizes = [18, 1], strides = [1, 1]} : vector<18x8xf32> to vector<18x1xf32>
    %159 = vector.broadcast %158 : vector<18x1xf32> to vector<18x8xf32>
    %160 = arith.mulf %157, %159 : vector<18x8xf32>
    %161 = arith.truncf %160 : vector<18x8xf32> to vector<18x8xbf16>
    %cst_55 = arith.constant dense<0.000000e+00> : vector<18x8xf32>
    %162 = tpu.matmul %156, %161, %cst_55 {dimension_numbers = #tpu.dot_dimension_numbers<[1], [0], [0], [1], [0, 0, 1, 1], [], []>} : vector<18x18xbf16>, vector<18x8xbf16>, vector<18x8xf32> -> vector<18x8xf32>
    %163 = vector.extract_strided_slice %121 {offsets = [0, 2], sizes = [18, 1], strides = [1, 1]} : vector<18x8xf32> to vector<18x1xf32>
    %164 = vector.broadcast %163 : vector<18x1xf32> to vector<18x18xf32>
    %165 = arith.mulf %118, %164 : vector<18x18xf32>
    %cst_56 = arith.constant dense<0.000000e+00> : vector<18xf32>
    %166 = vector.multi_reduction <add>, %165, %cst_56 [0] : vector<18x18xf32> to vector<18xf32>
    %167 = vector.shape_cast %166 : vector<18xf32> to vector<1x18xf32>
    %168 = vector.broadcast %163 : vector<18x1xf32> to vector<18x18xf32>
    %169 = vector.broadcast %167 : vector<1x18xf32> to vector<18x18xf32>
    %170 = arith.subf %168, %169 : vector<18x18xf32>
    %cst_57 = arith.constant -1.000000e+30 : f32
    %171 = vector.broadcast %cst_57 : f32 to vector<18x18xf32>
    %172 = arith.select %113, %170, %171 : vector<18x18xi1>, vector<18x18xf32>
    %173 = math.exp %172 : vector<18x18xf32>
    %174 = arith.mulf %124, %173 : vector<18x18xf32>
    %175 = arith.truncf %174 : vector<18x18xf32> to vector<18x18xbf16>
    %176 = vector.extract_strided_slice %92 {offsets = [0, 16], sizes = [18, 8], strides = [1, 1]} : vector<18x64xf32> to vector<18x8xf32>
    %177 = vector.extract_strided_slice %106 {offsets = [0, 2], sizes = [18, 1], strides = [1, 1]} : vector<18x8xf32> to vector<18x1xf32>
    %178 = vector.broadcast %177 : vector<18x1xf32> to vector<18x8xf32>
    %179 = arith.mulf %176, %178 : vector<18x8xf32>
    %180 = arith.truncf %179 : vector<18x8xf32> to vector<18x8xbf16>
    %cst_58 = arith.constant dense<0.000000e+00> : vector<18x8xf32>
    %181 = tpu.matmul %175, %180, %cst_58 {dimension_numbers = #tpu.dot_dimension_numbers<[1], [0], [0], [1], [0, 0, 1, 1], [], []>} : vector<18x18xbf16>, vector<18x8xbf16>, vector<18x8xf32> -> vector<18x8xf32>
    %182 = vector.extract_strided_slice %121 {offsets = [0, 3], sizes = [18, 1], strides = [1, 1]} : vector<18x8xf32> to vector<18x1xf32>
    %183 = vector.broadcast %182 : vector<18x1xf32> to vector<18x18xf32>
    %184 = arith.mulf %118, %183 : vector<18x18xf32>
    %cst_59 = arith.constant dense<0.000000e+00> : vector<18xf32>
    %185 = vector.multi_reduction <add>, %184, %cst_59 [0] : vector<18x18xf32> to vector<18xf32>
    %186 = vector.shape_cast %185 : vector<18xf32> to vector<1x18xf32>
    %187 = vector.broadcast %182 : vector<18x1xf32> to vector<18x18xf32>
    %188 = vector.broadcast %186 : vector<1x18xf32> to vector<18x18xf32>
    %189 = arith.subf %187, %188 : vector<18x18xf32>
    %cst_60 = arith.constant -1.000000e+30 : f32
    %190 = vector.broadcast %cst_60 : f32 to vector<18x18xf32>
    %191 = arith.select %113, %189, %190 : vector<18x18xi1>, vector<18x18xf32>
    %192 = math.exp %191 : vector<18x18xf32>
    %193 = arith.mulf %124, %192 : vector<18x18xf32>
    %194 = arith.truncf %193 : vector<18x18xf32> to vector<18x18xbf16>
    %195 = vector.extract_strided_slice %92 {offsets = [0, 24], sizes = [18, 8], strides = [1, 1]} : vector<18x64xf32> to vector<18x8xf32>
    %196 = vector.extract_strided_slice %106 {offsets = [0, 3], sizes = [18, 1], strides = [1, 1]} : vector<18x8xf32> to vector<18x1xf32>
    %197 = vector.broadcast %196 : vector<18x1xf32> to vector<18x8xf32>
    %198 = arith.mulf %195, %197 : vector<18x8xf32>
    %199 = arith.truncf %198 : vector<18x8xf32> to vector<18x8xbf16>
    %cst_61 = arith.constant dense<0.000000e+00> : vector<18x8xf32>
    %200 = tpu.matmul %194, %199, %cst_61 {dimension_numbers = #tpu.dot_dimension_numbers<[1], [0], [0], [1], [0, 0, 1, 1], [], []>} : vector<18x18xbf16>, vector<18x8xbf16>, vector<18x8xf32> -> vector<18x8xf32>
    %201 = vector.extract_strided_slice %121 {offsets = [0, 4], sizes = [18, 1], strides = [1, 1]} : vector<18x8xf32> to vector<18x1xf32>
    %202 = vector.broadcast %201 : vector<18x1xf32> to vector<18x18xf32>
    %203 = arith.mulf %118, %202 : vector<18x18xf32>
    %cst_62 = arith.constant dense<0.000000e+00> : vector<18xf32>
    %204 = vector.multi_reduction <add>, %203, %cst_62 [0] : vector<18x18xf32> to vector<18xf32>
    %205 = vector.shape_cast %204 : vector<18xf32> to vector<1x18xf32>
    %206 = vector.broadcast %201 : vector<18x1xf32> to vector<18x18xf32>
    %207 = vector.broadcast %205 : vector<1x18xf32> to vector<18x18xf32>
    %208 = arith.subf %206, %207 : vector<18x18xf32>
    %cst_63 = arith.constant -1.000000e+30 : f32
    %209 = vector.broadcast %cst_63 : f32 to vector<18x18xf32>
    %210 = arith.select %113, %208, %209 : vector<18x18xi1>, vector<18x18xf32>
    %211 = math.exp %210 : vector<18x18xf32>
    %212 = arith.mulf %124, %211 : vector<18x18xf32>
    %213 = arith.truncf %212 : vector<18x18xf32> to vector<18x18xbf16>
    %214 = vector.extract_strided_slice %92 {offsets = [0, 32], sizes = [18, 8], strides = [1, 1]} : vector<18x64xf32> to vector<18x8xf32>
    %215 = vector.extract_strided_slice %106 {offsets = [0, 4], sizes = [18, 1], strides = [1, 1]} : vector<18x8xf32> to vector<18x1xf32>
    %216 = vector.broadcast %215 : vector<18x1xf32> to vector<18x8xf32>
    %217 = arith.mulf %214, %216 : vector<18x8xf32>
    %218 = arith.truncf %217 : vector<18x8xf32> to vector<18x8xbf16>
    %cst_64 = arith.constant dense<0.000000e+00> : vector<18x8xf32>
    %219 = tpu.matmul %213, %218, %cst_64 {dimension_numbers = #tpu.dot_dimension_numbers<[1], [0], [0], [1], [0, 0, 1, 1], [], []>} : vector<18x18xbf16>, vector<18x8xbf16>, vector<18x8xf32> -> vector<18x8xf32>
    %220 = vector.extract_strided_slice %121 {offsets = [0, 5], sizes = [18, 1], strides = [1, 1]} : vector<18x8xf32> to vector<18x1xf32>
    %221 = vector.broadcast %220 : vector<18x1xf32> to vector<18x18xf32>
    %222 = arith.mulf %118, %221 : vector<18x18xf32>
    %cst_65 = arith.constant dense<0.000000e+00> : vector<18xf32>
    %223 = vector.multi_reduction <add>, %222, %cst_65 [0] : vector<18x18xf32> to vector<18xf32>
    %224 = vector.shape_cast %223 : vector<18xf32> to vector<1x18xf32>
    %225 = vector.broadcast %220 : vector<18x1xf32> to vector<18x18xf32>
    %226 = vector.broadcast %224 : vector<1x18xf32> to vector<18x18xf32>
    %227 = arith.subf %225, %226 : vector<18x18xf32>
    %cst_66 = arith.constant -1.000000e+30 : f32
    %228 = vector.broadcast %cst_66 : f32 to vector<18x18xf32>
    %229 = arith.select %113, %227, %228 : vector<18x18xi1>, vector<18x18xf32>
    %230 = math.exp %229 : vector<18x18xf32>
    %231 = arith.mulf %124, %230 : vector<18x18xf32>
    %232 = arith.truncf %231 : vector<18x18xf32> to vector<18x18xbf16>
    %233 = vector.extract_strided_slice %92 {offsets = [0, 40], sizes = [18, 8], strides = [1, 1]} : vector<18x64xf32> to vector<18x8xf32>
    %234 = vector.extract_strided_slice %106 {offsets = [0, 5], sizes = [18, 1], strides = [1, 1]} : vector<18x8xf32> to vector<18x1xf32>
    %235 = vector.broadcast %234 : vector<18x1xf32> to vector<18x8xf32>
    %236 = arith.mulf %233, %235 : vector<18x8xf32>
    %237 = arith.truncf %236 : vector<18x8xf32> to vector<18x8xbf16>
    %cst_67 = arith.constant dense<0.000000e+00> : vector<18x8xf32>
    %238 = tpu.matmul %232, %237, %cst_67 {dimension_numbers = #tpu.dot_dimension_numbers<[1], [0], [0], [1], [0, 0, 1, 1], [], []>} : vector<18x18xbf16>, vector<18x8xbf16>, vector<18x8xf32> -> vector<18x8xf32>
    %239 = vector.extract_strided_slice %121 {offsets = [0, 6], sizes = [18, 1], strides = [1, 1]} : vector<18x8xf32> to vector<18x1xf32>
    %240 = vector.broadcast %239 : vector<18x1xf32> to vector<18x18xf32>
    %241 = arith.mulf %118, %240 : vector<18x18xf32>
    %cst_68 = arith.constant dense<0.000000e+00> : vector<18xf32>
    %242 = vector.multi_reduction <add>, %241, %cst_68 [0] : vector<18x18xf32> to vector<18xf32>
    %243 = vector.shape_cast %242 : vector<18xf32> to vector<1x18xf32>
    %244 = vector.broadcast %239 : vector<18x1xf32> to vector<18x18xf32>
    %245 = vector.broadcast %243 : vector<1x18xf32> to vector<18x18xf32>
    %246 = arith.subf %244, %245 : vector<18x18xf32>
    %cst_69 = arith.constant -1.000000e+30 : f32
    %247 = vector.broadcast %cst_69 : f32 to vector<18x18xf32>
    %248 = arith.select %113, %246, %247 : vector<18x18xi1>, vector<18x18xf32>
    %249 = math.exp %248 : vector<18x18xf32>
    %250 = arith.mulf %124, %249 : vector<18x18xf32>
    %251 = arith.truncf %250 : vector<18x18xf32> to vector<18x18xbf16>
    %252 = vector.extract_strided_slice %92 {offsets = [0, 48], sizes = [18, 8], strides = [1, 1]} : vector<18x64xf32> to vector<18x8xf32>
    %253 = vector.extract_strided_slice %106 {offsets = [0, 6], sizes = [18, 1], strides = [1, 1]} : vector<18x8xf32> to vector<18x1xf32>
    %254 = vector.broadcast %253 : vector<18x1xf32> to vector<18x8xf32>
    %255 = arith.mulf %252, %254 : vector<18x8xf32>
    %256 = arith.truncf %255 : vector<18x8xf32> to vector<18x8xbf16>
    %cst_70 = arith.constant dense<0.000000e+00> : vector<18x8xf32>
    %257 = tpu.matmul %251, %256, %cst_70 {dimension_numbers = #tpu.dot_dimension_numbers<[1], [0], [0], [1], [0, 0, 1, 1], [], []>} : vector<18x18xbf16>, vector<18x8xbf16>, vector<18x8xf32> -> vector<18x8xf32>
    %258 = vector.extract_strided_slice %121 {offsets = [0, 7], sizes = [18, 1], strides = [1, 1]} : vector<18x8xf32> to vector<18x1xf32>
    %259 = vector.broadcast %258 : vector<18x1xf32> to vector<18x18xf32>
    %260 = arith.mulf %118, %259 : vector<18x18xf32>
    %cst_71 = arith.constant dense<0.000000e+00> : vector<18xf32>
    %261 = vector.multi_reduction <add>, %260, %cst_71 [0] : vector<18x18xf32> to vector<18xf32>
    %262 = vector.shape_cast %261 : vector<18xf32> to vector<1x18xf32>
    %263 = vector.broadcast %258 : vector<18x1xf32> to vector<18x18xf32>
    %264 = vector.broadcast %262 : vector<1x18xf32> to vector<18x18xf32>
    %265 = arith.subf %263, %264 : vector<18x18xf32>
    %cst_72 = arith.constant -1.000000e+30 : f32
    %266 = vector.broadcast %cst_72 : f32 to vector<18x18xf32>
    %267 = arith.select %113, %265, %266 : vector<18x18xi1>, vector<18x18xf32>
    %268 = math.exp %267 : vector<18x18xf32>
    %269 = arith.mulf %124, %268 : vector<18x18xf32>
    %270 = arith.truncf %269 : vector<18x18xf32> to vector<18x18xbf16>
    %271 = vector.extract_strided_slice %92 {offsets = [0, 56], sizes = [18, 8], strides = [1, 1]} : vector<18x64xf32> to vector<18x8xf32>
    %272 = vector.extract_strided_slice %106 {offsets = [0, 7], sizes = [18, 1], strides = [1, 1]} : vector<18x8xf32> to vector<18x1xf32>
    %273 = vector.broadcast %272 : vector<18x1xf32> to vector<18x8xf32>
    %274 = arith.mulf %271, %273 : vector<18x8xf32>
    %275 = arith.truncf %274 : vector<18x8xf32> to vector<18x8xbf16>
    %cst_73 = arith.constant dense<0.000000e+00> : vector<18x8xf32>
    %276 = tpu.matmul %270, %275, %cst_73 {dimension_numbers = #tpu.dot_dimension_numbers<[1], [0], [0], [1], [0, 0, 1, 1], [], []>} : vector<18x18xbf16>, vector<18x8xbf16>, vector<18x8xf32> -> vector<18x8xf32>
    %277 = tpu.concatenate %143, %162, %181, %200, %219, %238, %257, %276 in 1 : vector<18x8xf32>, vector<18x8xf32>, vector<18x8xf32>, vector<18x8xf32>, vector<18x8xf32>, vector<18x8xf32>, vector<18x8xf32>, vector<18x8xf32> -> vector<18x64xf32>
    %278 = vector.broadcast %6 : vector<1x64xf32> to vector<18x64xf32>
    %279 = arith.mulf %278, %92 : vector<18x64xf32>
    %280 = arith.addf %277, %279 : vector<18x64xf32>
    %cst_74 = arith.constant 0.000000e+00 : f32
    %281 = vector.broadcast %cst_74 : f32 to vector<18x64xf32>
    %282 = arith.subf %281, %31 : vector<18x64xf32>
    %283 = math.exp %282 : vector<18x64xf32>
    %cst_75 = arith.constant 1.000000e+00 : f32
    %284 = vector.broadcast %cst_75 : f32 to vector<18x64xf32>
    %285 = arith.addf %284, %283 : vector<18x64xf32>
    %cst_76 = arith.constant 1.000000e+00 : f32
    %286 = vector.broadcast %cst_76 : f32 to vector<18x64xf32>
    %287 = arith.divf %286, %285 : vector<18x64xf32>
    %288 = arith.mulf %31, %287 : vector<18x64xf32>
    %289 = arith.mulf %280, %288 : vector<18x64xf32>
    %290 = arith.mulf %289, %289 : vector<18x64xf32>
    %cst_77 = arith.constant dense<0.000000e+00> : vector<18xf32>
    %291 = vector.multi_reduction <add>, %290, %cst_77 [1] : vector<18x64xf32> to vector<18xf32>
    %292 = vector.shape_cast %291 : vector<18xf32> to vector<18x1xf32>
    %cst_78 = arith.constant 6.400000e+01 : f32
    %293 = vector.broadcast %cst_78 : f32 to vector<18x1xf32>
    %294 = arith.divf %292, %293 : vector<18x1xf32>
    %cst_79 = arith.constant 9.99999974E-6 : f32
    %295 = vector.broadcast %cst_79 : f32 to vector<18x1xf32>
    %296 = arith.addf %294, %295 : vector<18x1xf32>
    %297 = math.rsqrt %296 : vector<18x1xf32>
    %298 = vector.broadcast %297 : vector<18x1xf32> to vector<18x64xf32>
    %299 = arith.mulf %289, %298 : vector<18x64xf32>
    %300 = vector.broadcast %7 : vector<1x64xf32> to vector<18x64xf32>
    %301 = arith.mulf %299, %300 : vector<18x64xf32>
    %302 = arith.truncf %301 : vector<18x64xf32> to vector<18x64xbf16>
    %c0_80 = arith.constant 0 : index
    %c0_81 = arith.constant 0 : index
    %303 = vector.load %arg7[%c0_80, %c0_81] : memref<64x32xbf16, #tpu.memory_space<vmem>>, vector<64x32xbf16>
    %cst_82 = arith.constant dense<0.000000e+00> : vector<18x32xf32>
    %304 = tpu.matmul %302, %303, %cst_82 {dimension_numbers = #tpu.dot_dimension_numbers<[1], [0], [0], [1], [0, 0, 1, 1], [], []>} : vector<18x64xbf16>, vector<64x32xbf16>, vector<18x32xf32> -> vector<18x32xf32>
    %cst_83 = arith.constant dense<0.000000e+00> : vector<18xf32>
    %305 = vector.multi_reduction <add>, %304, %cst_83 [1] : vector<18x32xf32> to vector<18xf32>
    %306 = vector.shape_cast %305 : vector<18xf32> to vector<18x1xf32>
    %cst_84 = arith.constant 3.200000e+01 : f32
    %307 = vector.broadcast %cst_84 : f32 to vector<18x1xf32>
    %308 = arith.divf %306, %307 : vector<18x1xf32>
    %309 = vector.broadcast %308 : vector<18x1xf32> to vector<18x32xf32>
    %310 = arith.subf %304, %309 : vector<18x32xf32>
    %311 = arith.mulf %310, %310 : vector<18x32xf32>
    %cst_85 = arith.constant dense<0.000000e+00> : vector<18xf32>
    %312 = vector.multi_reduction <add>, %311, %cst_85 [1] : vector<18x32xf32> to vector<18xf32>
    %313 = vector.shape_cast %312 : vector<18xf32> to vector<18x1xf32>
    %cst_86 = arith.constant 3.200000e+01 : f32
    %314 = vector.broadcast %cst_86 : f32 to vector<18x1xf32>
    %315 = arith.divf %313, %314 : vector<18x1xf32>
    %cst_87 = arith.constant 9.99999974E-6 : f32
    %316 = vector.broadcast %cst_87 : f32 to vector<18x1xf32>
    %317 = arith.addf %315, %316 : vector<18x1xf32>
    %318 = math.rsqrt %317 : vector<18x1xf32>
    %319 = vector.broadcast %318 : vector<18x1xf32> to vector<18x32xf32>
    %320 = arith.mulf %310, %319 : vector<18x32xf32>
    %321 = vector.broadcast %8 : vector<1x32xf32> to vector<18x32xf32>
    %322 = arith.mulf %320, %321 : vector<18x32xf32>
    %323 = vector.broadcast %9 : vector<1x32xf32> to vector<18x32xf32>
    %324 = arith.addf %322, %323 : vector<18x32xf32>
    %325 = vector.extract_strided_slice %324 {offsets = [0, 0], sizes = [9, 32], strides = [1, 1]} : vector<18x32xf32> to vector<9x32xf32>
    %c0_88 = arith.constant 0 : index
    %c0_89 = arith.constant 0 : index
    %c0_90 = arith.constant 0 : index
    %326 = vector.load %arg8[%c0_88, %c0_89, %c0_90] : memref<2x9x32xf32, #tpu.memory_space<vmem>>, vector<1x9x32xf32>
    %327 = vector.shape_cast %326 : vector<1x9x32xf32> to vector<9x32xf32>
    %328 = vector.shape_cast %325 : vector<9x32xf32> to vector<1x9x32xf32>
    tpu.vector_store %arg8[%c0_88, %c0_89, %c0_90], %328 {strides = array<i32>} : memref<2x9x32xf32, #tpu.memory_space<vmem>>, vector<1x9x32xf32>,
    %329 = vector.extract_strided_slice %324 {offsets = [9, 0], sizes = [9, 32], strides = [1, 1]} : vector<18x32xf32> to vector<9x32xf32>
    %c1_91 = arith.constant 1 : index
    %c0_92 = arith.constant 0 : index
    %c0_93 = arith.constant 0 : index
    %330 = vector.load %arg8[%c1_91, %c0_92, %c0_93] : memref<2x9x32xf32, #tpu.memory_space<vmem>>, vector<1x9x32xf32>
    %331 = vector.shape_cast %330 : vector<1x9x32xf32> to vector<9x32xf32>
    %332 = vector.shape_cast %329 : vector<9x32xf32> to vector<1x9x32xf32>
    tpu.vector_store %arg8[%c1_91, %c0_92, %c0_93], %332 {strides = array<i32>} : memref<2x9x32xf32, #tpu.memory_space<vmem>>, vector<1x9x32xf32>,
    return
  }
  func.func @transform_0(%arg0: i32) -> (i32, i32, i32) {
    %c0_i32 = arith.constant 0 : i32
    %c0_i32_0 = arith.constant 0 : i32
    %c0_i32_1 = arith.constant 0 : i32
    return %arg0, %c0_i32, %c0_i32_0 : i32, i32, i32
  }
  func.func @transform_1(%arg0: i32) -> (i32, i32) {
    %c0_i32 = arith.constant 0 : i32
    %c0_i32_0 = arith.constant 0 : i32
    %c0_i32_1 = arith.constant 0 : i32
    return %c0_i32, %c0_i32_0 : i32, i32
  }
  func.func @transform_2(%arg0: i32) -> (i32, i32) {
    %c0_i32 = arith.constant 0 : i32
    %c0_i32_0 = arith.constant 0 : i32
    %c0_i32_1 = arith.constant 0 : i32
    return %c0_i32, %c0_i32_0 : i32, i32
  }
  func.func @transform_3(%arg0: i32) -> (i32, i32) {
    %c0_i32 = arith.constant 0 : i32
    %c0_i32_0 = arith.constant 0 : i32
    %c0_i32_1 = arith.constant 0 : i32
    return %c0_i32, %c0_i32_0 : i32, i32
  }
  func.func @transform_4(%arg0: i32) -> (i32, i32) {
    %c0_i32 = arith.constant 0 : i32
    %c0_i32_0 = arith.constant 0 : i32
    %c0_i32_1 = arith.constant 0 : i32
    return %c0_i32, %c0_i32_0 : i32, i32
  }
  func.func @transform_5(%arg0: i32) -> (i32, i32) {
    %c0_i32 = arith.constant 0 : i32
    %c0_i32_0 = arith.constant 0 : i32
    %c0_i32_1 = arith.constant 0 : i32
    return %c0_i32, %c0_i32_0 : i32, i32
  }
  func.func @transform_6(%arg0: i32) -> (i32, i32) {
    %c0_i32 = arith.constant 0 : i32
    %c0_i32_0 = arith.constant 0 : i32
    %c0_i32_1 = arith.constant 0 : i32
    return %c0_i32, %c0_i32_0 : i32, i32
  }
  func.func @transform_7(%arg0: i32) -> (i32, i32, i32) {
    %c0_i32 = arith.constant 0 : i32
    %c0_i32_0 = arith.constant 0 : i32
    %c0_i32_1 = arith.constant 0 : i32
    return %arg0, %c0_i32, %c0_i32_0 : i32, i32, i32
  }
}

</mosaic_0001>

<llo_original>
// kernel: timae_mamba_encoder_forward.1
$region0: #{timae_mamba_encoder_forward.1}
  #allocation0 [shape = 'u32[]', space=smem, size = 0x4, offset = 0x4, fixed_abs, tag = 'smem constant byte address 0x4 - core index']
  #allocation1 [shape = 'u32[144,128]{1,0:T(1,128)}', space=vmem, size = 0x12000, scoped, tag = 'internal scratch']
  #allocation2 [shape = 'f32[18,32]{1,0:T(8,128)}', space=vmem, size = 0x3000, scoped, tag = 'scratch operand']
  #allocation3 [shape = 'f32[21,128]{1,0:T(8,128)}', space=vmem, size = 0x3000, scoped, tag = 'scratch operand']
  %s0 = inlined_call_operand.vmem [shape: f32[4,8,12], index: 0, kind: input, shape index: {}]
  %s1 = inlined_call_operand.vmem [shape: f32[9,128], index: 1, kind: input, shape index: {}]
  %s2 = inlined_call_operand.vmem [shape: bf16[12,32], index: 2, kind: input, shape index: {}]
  %s3 = inlined_call_operand.vmem [shape: bf16[32,72], index: 3, kind: input, shape index: {}]
  %s4 = inlined_call_operand.vmem [shape: bf16[32,128], index: 4, kind: input, shape index: {}]
  %s5 = inlined_call_operand.vmem [shape: f32[4,128], index: 5, kind: input, shape index: {}]
  %s6 = inlined_call_operand.vmem [shape: bf16[64,32], index: 6, kind: input, shape index: {}]
  %s7 = inlined_call_operand.vmem [shape: f32[4,9,32], index: 7, kind: output, shape index: {}]
  %s8 = sld [smem:[#allocation0]]
  $region61: #{timae_mamba_encoder_forward.1} parent=0
    _
  %s10 = ssub.s32 1, %s8
  %s11 = scalar_select 0, %s10, %s8
  loop: start=0, step=1, limit=4
  $region2: #{timae_mamba_encoder_forward.1} parent=0 // loop_pre_header
    _
  $region3: #{timae_mamba_encoder_forward.1} parent=0 // loop_header
    %s13 = sphi 0, %s17
    %p14 = scmp.ge.s32.totalorder %s13, 4
    %s23 = sphi 0, %s25
    %s26 = sphi 0, %s23
    %s27 = sphi 0, %s26
    %s43 = sphi 0, %s27
    %s47 = sphi 0, %s47
    %s49 = sphi 0, %s47
    %s50 = sphi 0, %s49
    %s64 = sphi 0, %s50
    %s68 = sphi 0, %s68
    %s70 = sphi 0, %s68
    %s71 = sphi 0, %s70
    %s85 = sphi 0, %s71
    %s89 = sphi 0, %s89
    %s91 = sphi 0, %s89
    %s92 = sphi 0, %s91
    %s106 = sphi 0, %s92
    %s110 = sphi 0, %s110
    %s112 = sphi 0, %s110
    %s113 = sphi 0, %s112
    %s127 = sphi 0, %s113
    %s131 = sphi 0, %s131
    %s133 = sphi 0, %s131
    %s134 = sphi 0, %s133
    %s148 = sphi 0, %s134
    %s152 = sphi 0, %s152
    %s154 = sphi 0, %s152
    %s155 = sphi 0, %s154
    %s169 = sphi 0, %s155
    %s175 = sphi 0, %s177
    %s178 = sphi 0, %s175
    %s179 = sphi 0, %s178
    %s195 = sphi 0, %s179
  $region4: #{timae_mamba_encoder_forward.1} parent=0 // loop_header_branch
    %16 = sbr.rel (%p14) target = $region8
  $region5: #{timae_mamba_encoder_forward.1} parent=0 // loop_body
    %s18 = ssub.s32 %s13, 1
    %s19 = ssub.s32 %s13, 2
    %s20 = sadd.s32 %s13, 1
    %s21 = ssub.s32 %s13, %s20
    %p22 = scmp.eq.s32.totalorder %s21, 0
    %s24 = sadd.s32 %s23, 1
    %s25 = scalar_select %p22, %s23, %s24
    %p28 = pneg %p22
    %p29 = scmp.eq.s32.totalorder %s13, 1
    %p30 = por %p28, %p29
    %p31 = scmp.ne.s32.totalorder %s23, %s26
    %p32 = scmp.eq.s32.totalorder %s13, 0
    %p33 = por %p31, %p32
    %p34 = scmp.ne.s32.totalorder %s23, %s26
    %p35 = scmp.eq.s32.totalorder %s18, 1
    %p36 = por %p34, %p35
    %p37 = scmp.ne.s32.totalorder %s26, %s27
    %p38 = scmp.eq.s32.totalorder %s18, 0
    %p39 = por %p37, %p38
    %p40 = scmp.ne.s32.totalorder %s26, %s27
    %p41 = scmp.eq.s32.totalorder %s19, 1
    %p42 = por %p40, %p41
    %p44 = scmp.ne.s32.totalorder %s27, %s43
    %p45 = scmp.eq.s32.totalorder %s19, 0
    %p46 = por %p44, %p45
    %s48 = sadd.s32 %s47, 1
    %p51 = scmp.eq.s32.totalorder %s13, 1
    %p52 = scmp.ne.s32.totalorder %s47, %s49
    %p53 = scmp.eq.s32.totalorder %s13, 0
    %p54 = por %p52, %p53
    %p55 = scmp.ne.s32.totalorder %s47, %s49
    %p56 = scmp.eq.s32.totalorder %s18, 1
    %p57 = por %p55, %p56
    %p58 = scmp.ne.s32.totalorder %s49, %s50
    %p59 = scmp.eq.s32.totalorder %s18, 0
    %p60 = por %p58, %p59
    %p61 = scmp.ne.s32.totalorder %s49, %s50
    %p62 = scmp.eq.s32.totalorder %s19, 1
    %p63 = por %p61, %p62
    %p65 = scmp.ne.s32.totalorder %s50, %s64
    %p66 = scmp.eq.s32.totalorder %s19, 0
    %p67 = por %p65, %p66
    %s69 = sadd.s32 %s68, 1
    %p72 = scmp.eq.s32.totalorder %s13, 1
    %p73 = scmp.ne.s32.totalorder %s68, %s70
    %p74 = scmp.eq.s32.totalorder %s13, 0
    %p75 = por %p73, %p74
    %p76 = scmp.ne.s32.totalorder %s68, %s70
    %p77 = scmp.eq.s32.totalorder %s18, 1
    %p78 = por %p76, %p77
    %p79 = scmp.ne.s32.totalorder %s70, %s71
    %p80 = scmp.eq.s32.totalorder %s18, 0
    %p81 = por %p79, %p80
    %p82 = scmp.ne.s32.totalorder %s70, %s71
    %p83 = scmp.eq.s32.totalorder %s19, 1
    %p84 = por %p82, %p83
    %p86 = scmp.ne.s32.totalorder %s71, %s85
    %p87 = scmp.eq.s32.totalorder %s19, 0
    %p88 = por %p86, %p87
    %s90 = sadd.s32 %s89, 1
    %p93 = scmp.eq.s32.totalorder %s13, 1
    %p94 = scmp.ne.s32.totalorder %s89, %s91
    %p95 = scmp.eq.s32.totalorder %s13, 0
    %p96 = por %p94, %p95
    %p97 = scmp.ne.s32.totalorder %s89, %s91
    %p98 = scmp.eq.s32.totalorder %s18, 1
    %p99 = por %p97, %p98
    %p100 = scmp.ne.s32.totalorder %s91, %s92
    %p101 = scmp.eq.s32.totalorder %s18, 0
    %p102 = por %p100, %p101
    %p103 = scmp.ne.s32.totalorder %s91, %s92
    %p104 = scmp.eq.s32.totalorder %s19, 1
    %p105 = por %p103, %p104
    %p107 = scmp.ne.s32.totalorder %s92, %s106
    %p108 = scmp.eq.s32.totalorder %s19, 0
    %p109 = por %p107, %p108
    %s111 = sadd.s32 %s110, 1
    %p114 = scmp.eq.s32.totalorder %s13, 1
    %p115 = scmp.ne.s32.totalorder %s110, %s112
    %p116 = scmp.eq.s32.totalorder %s13, 0
    %p117 = por %p115, %p116
    %p118 = scmp.ne.s32.totalorder %s110, %s112
    %p119 = scmp.eq.s32.totalorder %s18, 1
    %p120 = por %p118, %p119
    %p121 = scmp.ne.s32.totalorder %s112, %s113
    %p122 = scmp.eq.s32.totalorder %s18, 0
    %p123 = por %p121, %p122
    %p124 = scmp.ne.s32.totalorder %s112, %s113
    %p125 = scmp.eq.s32.totalorder %s19, 1
    %p126 = por %p124, %p125
    %p128 = scmp.ne.s32.totalorder %s113, %s127
    %p129 = scmp.eq.s32.totalorder %s19, 0
    %p130 = por %p128, %p129
    %s132 = sadd.s32 %s131, 1
    %p135 = scmp.eq.s32.totalorder %s13, 1
    %p136 = scmp.ne.s32.totalorder %s131, %s133
    %p137 = scmp.eq.s32.totalorder %s13, 0
    %p138 = por %p136, %p137
    %p139 = scmp.ne.s32.totalorder %s131, %s133
    %p140 = scmp.eq.s32.totalorder %s18, 1
    %p141 = por %p139, %p140
    %p142 = scmp.ne.s32.totalorder %s133, %s134
    %p143 = scmp.eq.s32.totalorder %s18, 0
    %p144 = por %p142, %p143
    %p145 = scmp.ne.s32.totalorder %s133, %s134
    %p146 = scmp.eq.s32.totalorder %s19, 1
    %p147 = por %p145, %p146
    %p149 = scmp.ne.s32.totalorder %s134, %s148
    %p150 = scmp.eq.s32.totalorder %s19, 0
    %p151 = por %p149, %p150
    %s153 = sadd.s32 %s152, 1
    %p156 = scmp.eq.s32.totalorder %s13, 1
    %p157 = scmp.ne.s32.totalorder %s152, %s154
    %p158 = scmp.eq.s32.totalorder %s13, 0
    %p159 = por %p157, %p158
    %p160 = scmp.ne.s32.totalorder %s152, %s154
    %p161 = scmp.eq.s32.totalorder %s18, 1
    %p162 = por %p160, %p161
    %p163 = scmp.ne.s32.totalorder %s154, %s155
    %p164 = scmp.eq.s32.totalorder %s18, 0
    %p165 = por %p163, %p164
    %p166 = scmp.ne.s32.totalorder %s154, %s155
    %p167 = scmp.eq.s32.totalorder %s19, 1
    %p168 = por %p166, %p167
    %p170 = scmp.ne.s32.totalorder %s155, %s169
    %p171 = scmp.eq.s32.totalorder %s19, 0
    %p172 = por %p170, %p171
    %s173 = ssub.s32 %s13, %s20
    %p174 = scmp.eq.s32.totalorder %s173, 0
    %s176 = sadd.s32 %s175, 1
    %s177 = scalar_select %p174, %s175, %s176
    %p180 = pneg %p174
    %p181 = scmp.eq.s32.totalorder %s13, 1
    %p182 = por %p180, %p181
    %p183 = scmp.ne.s32.totalorder %s175, %s178
    %p184 = scmp.eq.s32.totalorder %s13, 0
    %p185 = por %p183, %p184
    %p186 = scmp.ne.s32.totalorder %s175, %s178
    %p187 = scmp.eq.s32.totalorder %s18, 1
    %p188 = por %p186, %p187
    %p189 = scmp.ne.s32.totalorder %s178, %s179
    %p190 = scmp.eq.s32.totalorder %s18, 0
    %p191 = por %p189, %p190
    %p192 = scmp.ne.s32.totalorder %s178, %s179
    %p193 = scmp.eq.s32.totalorder %s19, 1
    %p194 = por %p192, %p193
    %p196 = scmp.ne.s32.totalorder %s179, %s195
    %p197 = scmp.eq.s32.totalorder %s19, 0
    %p198 = por %p196, %p197
    %p199 = scmp.le.s32.totalorder 1, %s13
    %p200 = scmp.lt.s32.totalorder %s13, 3
    %p201 = pnand %p199, %p200
    %p202 = pneg %p201
    // Predicated region
    $region9: #{timae_mamba_encoder_forward.1} parent=5 // pred_check
      _
    $region10: #{timae_mamba_encoder_forward.1} parent=5 // pred_check_branch
      %204 = sbr.rel (%p201) target = $region12
    $region11: #{timae_mamba_encoder_forward.1} parent=5 // pred_region
      %s205 = ssub.s32 %s13, 1
      // Predicated region
      $region13: #{timae_mamba_encoder_forward.1} parent=11 // pred_check
        %p206 = pneg %p60
      $region14: #{timae_mamba_encoder_forward.1} parent=11 // pred_check_branch
        %208 = sbr.rel (%p206) target = $region16
      $region15: #{timae_mamba_encoder_forward.1} parent=11 // pred_region
        _
      $region16: #{timae_mamba_encoder_forward.1} parent=11 // pred_fallthru
        _
      // Predicated region
      $region17: #{timae_mamba_encoder_forward.1} parent=11 // pred_check
        %p209 = pneg %p81
      $region18: #{timae_mamba_encoder_forward.1} parent=11 // pred_check_branch
        %211 = sbr.rel (%p209) target = $region20
      $region19: #{timae_mamba_encoder_forward.1} parent=11 // pred_region
        _
      $region20: #{timae_mamba_encoder_forward.1} parent=11 // pred_fallthru
        _
      // Predicated region
      $region21: #{timae_mamba_encoder_forward.1} parent=11 // pred_check
        %p212 = pneg %p102
      $region22: #{timae_mamba_encoder_forward.1} parent=11 // pred_check_branch
        %214 = sbr.rel (%p212) target = $region24
      $region23: #{timae_mamba_encoder_forward.1} parent=11 // pred_region
        _
      $region24: #{timae_mamba_encoder_forward.1} parent=11 // pred_fallthru
        _
      // Predicated region
      $region25: #{timae_mamba_encoder_forward.1} parent=11 // pred_check
        %p215 = pneg %p123
      $region26: #{timae_mamba_encoder_forward.1} parent=11 // pred_check_branch
        %217 = sbr.rel (%p215) target = $region28
      $region27: #{timae_mamba_encoder_forward.1} parent=11 // pred_region
        _
      $region28: #{timae_mamba_encoder_forward.1} parent=11 // pred_fallthru
        _
      // Predicated region
      $region29: #{timae_mamba_encoder_forward.1} parent=11 // pred_check
        %p218 = pneg %p144
      $region30: #{timae_mamba_encoder_forward.1} parent=11 // pred_check_branch
        %220 = sbr.rel (%p218) target = $region32
      $region31: #{timae_mamba_encoder_forward.1} parent=11 // pred_region
        _
      $region32: #{timae_mamba_encoder_forward.1} parent=11 // pred_fallthru
        _
      // Predicated region
      $region33: #{timae_mamba_encoder_forward.1} parent=11 // pred_check
        %p221 = pneg %p165
      $region34: #{timae_mamba_encoder_forward.1} parent=11 // pred_check_branch
        %223 = sbr.rel (%p221) target = $region36
      $region35: #{timae_mamba_encoder_forward.1} parent=11 // pred_region
        _
      $region36: #{timae_mamba_encoder_forward.1} parent=11 // pred_fallthru
        _
    $region12: #{timae_mamba_encoder_forward.1} parent=5 // pred_fallthru
      _
    %p224 = scmp.lt.s32.totalorder %s13, 2
    // Predicated region
    $region37: #{timae_mamba_encoder_forward.1} parent=5 // pred_check
      %p225 = pneg %p224
    $region38: #{timae_mamba_encoder_forward.1} parent=5 // pred_check_branch
      %227 = sbr.rel (%p225) target = $region40
    $region39: #{timae_mamba_encoder_forward.1} parent=5 // pred_region
      // Predicated region
      $region41: #{timae_mamba_encoder_forward.1} parent=39 // pred_check
        %p228 = pneg %p33
      $region42: #{timae_mamba_encoder_forward.1} parent=39 // pred_check_branch
        %230 = sbr.rel (%p228) target = $region44
      $region43: #{timae_mamba_encoder_forward.1} parent=39 // pred_region
        %s231 = smul.u32 2, %s13
        %p232 = scmp.lt.s32.totalorder %s231, 3
        %s233 = scalar_select %p232, %s231, 3
        %s234 = smul.addr %s233, 8
        %s235 = scalar_lea.vmem %s0, %s234
        %s236 = smul.u32 2, %s13
      $region44: #{timae_mamba_encoder_forward.1} parent=39 // pred_fallthru
        _
    $region40: #{timae_mamba_encoder_forward.1} parent=5 // pred_fallthru
      _
    %p237 = scmp.le.s32.totalorder 1, %s13
    %p238 = scmp.lt.s32.totalorder %s13, 3
    %p239 = pnand %p237, %p238
    %p240 = pneg %p239
    // Predicated region
    $region45: #{timae_mamba_encoder_forward.1} parent=5 // pred_check
      _
    $region46: #{timae_mamba_encoder_forward.1} parent=5 // pred_check_branch
      %242 = sbr.rel (%p239) target = $region48
    $region47: #{timae_mamba_encoder_forward.1} parent=5 // pred_region
      %s243 = ssub.s32 %s13, 1
      %s244 = smul.u32 2, %s18
      %p245 = scmp.lt.s32.totalorder %s244, 3
      %s246 = scalar_select %p245, %s244, 3
      %s247 = smul.addr %s246, 8
      %s248 = scalar_lea.vmem %s0, %s247
      %p249 = pneg %p39
      %p250 = pneg %p36
      %p251 = pneg %p60
      %p252 = pneg %p57
      %p253 = pneg %p81
      %p254 = pneg %p78
      %p255 = pneg %p102
      %p256 = pneg %p99
      %p257 = pneg %p123
      %p258 = pneg %p120
      %p259 = pneg %p144
      %p260 = pneg %p141
      %p261 = pneg %p165
      %p262 = pneg %p162
      %p263 = pneg %p191
      %p264 = pneg %p188
      %s265 = smul.u32 2, %s18
      %p266 = scmp.lt.s32.totalorder %s265, 3
      %s267 = scalar_select %p266, %s265, 3
      %s268 = smul.addr %s267, 2
      %s269 = smul.addr %s268, 8
      %s270 = scalar_lea.vmem %s7, %s269
      %s271 = smul.u32 2, %s18
      %p272 = scmp.lt.s32.totalorder %s271, 3
      %s273 = scalar_select %p272, %s271, 3
      %s274 = smul.addr %s273, 8
      %s275 = scalar_lea.vmem %s0, %s274
      %s276 = smul.u32 2, %s18
      %s277 = smul.u32 2, %s18
      %p278 = scmp.lt.s32.totalorder %s277, 3
      %s279 = scalar_select %p278, %s277, 3
      %s280 = smul.addr %s279, 2
      %s281 = smul.addr %s280, 8
      %s282 = scalar_lea.vmem %s7, %s281
      %s283 = smul.u32 2, %s18
      %v285 = vld [vmem:[%s1] sm:$0xff]
      %v286 = vld [vmem:[%s1 + $0x8] sm:$0x1]
      %v287 = vld [vmem:[%s2] sm:$0xf]
      %v288 = vld [vmem:[%s2 + $0x4] sm:$0x3]
      %v289 = vld [vmem:[%s275] sm:$0xff]
      %v290 = vpack.c.bf16 %v289, %v289
      %v291 = vlaneseq
      %v292 = vshrl.u32 %v291, 7
      %v293 = vsub.s32 0, %v292
      %v294 = vrot.slane %v285, %v293
      %v297 = vunpack.c.l.b16 %v287
      %v298 = vunpack.c.l.b16 %v288
      %v299 = vpack.c.b16 %v298, %v297
      %vm300 = vcmask 97280
      %v302 = vsel %vm300, %v290, 0
      %vm304 = vcmask 1045504
      %v306 = vsel %vm304, %v299, 0
      %308 = vmatprep.subr.bf16.mxu0 0
      %309 = vmatpush1.bf16.msra.mxu0 %v306
      %310 = vmatprep.subr.bf16.mxu0 0
      %311 = vmatpush1.bf16.msra.mxu0 0
      %312 = vmatprep.subr.bf16.mxu0 0
      %313 = vmatpush1.bf16.msra.mxu0 0
      %314 = vmatprep.subr.bf16.mxu0 0
      %315 = vmatpush1.bf16.msra.mxu0 0
      %316 = vmatprep.subr.bf16.mxu0 0
      %317 = vmatpush1.bf16.msra.mxu0 0
      %318 = vmatprep.subr.bf16.mxu0 0
      %319 = vmatpush1.bf16.msra.mxu0 0
      %320 = vmatprep.subr.bf16.mxu0 0
      %321 = vmatpush1.bf16.msra.mxu0 0
      %322 = vmatprep.subr.bf16.mxu0 0
      %323 = vmatpush1.bf16.msra.mxu0 0
      %324 = vmatprep.subr.bf16.mxu0 0
      %325 = vmatpush1.bf16.msra.mxu0 0
      %326 = vmatprep.subr.bf16.mxu0 0
      %327 = vmatpush1.bf16.msra.mxu0 0
      %328 = vmatprep.subr.bf16.mxu0 0
      %329 = vmatpush1.bf16.msra.mxu0 0
      %330 = vmatprep.subr.bf16.mxu0 0
      %331 = vmatpush1.bf16.msra.mxu0 0
      %332 = vmatprep.subr.bf16.mxu0 0
      %333 = vmatpush1.bf16.msra.mxu0 0
      %334 = vmatprep.subr.bf16.mxu0 0
      %335 = vmatpush1.bf16.msra.mxu0 0
      %336 = vmatprep.subr.bf16.mxu0 0
      %337 = vmatpush1.bf16.msra.mxu0 0
      %338 = vmatprep.subr.bf16.mxu0 0
      %339 = vmatpush1.bf16.msra.mxu0 0
      %340 = vmatprep.mubr.bf16.mxu0 0
      %341 = vmatmul.mubr.bf16.gmra.mrb[0].mxu0 %v302
      %v342 = vpop.f32.mrb[0].mxu0
      %v343 = vadd.f32 %v294, %v342
      %v344 = vpop.f32.mrb[0].mxu0
      %v345 = vpop.f32.mrb[0].mxu0
      %v346 = vpop.f32.mrb[0].mxu0
      %347 = vdwg.mxu0
      %vm348 = vcmask 261120
      %349 = vst.msk [vmem:[#allocation2] sm:$0xff] %vm348, %v343
      %vm350 = vcmask 254977
      %351 = vst.msk [vmem:[#allocation2 + $0x7] sm:$0x2] %vm350, %v285
      %s352 = scalar_lea.vmem %s275, 8
      %v353 = vld [vmem:[%s352] sm:$0xff]
      %v354 = vpack.c.bf16 %v353, %v353
      %v356 = vsel %vm300, %v354, 0
      %358 = vmatprep.subr.bf16.mxu0 0
      %359 = vmatpush1.bf16.msra.mxu0 %v306
      %360 = vmatprep.subr.bf16.mxu0 0
      %361 = vmatpush1.bf16.msra.mxu0 0
      %362 = vmatprep.subr.bf16.mxu0 0
      %363 = vmatpush1.bf16.msra.mxu0 0
      %364 = vmatprep.subr.bf16.mxu0 0
      %365 = vmatpush1.bf16.msra.mxu0 0
      %366 = vmatprep.subr.bf16.mxu0 0
      %367 = vmatpush1.bf16.msra.mxu0 0
      %368 = vmatprep.subr.bf16.mxu0 0
      %369 = vmatpush1.bf16.msra.mxu0 0
      %370 = vmatprep.subr.bf16.mxu0 0
      %371 = vmatpush1.bf16.msra.mxu0 0
      %372 = vmatprep.subr.bf16.mxu0 0
      %373 = vmatpush1.bf16.msra.mxu0 0
      %374 = vmatprep.subr.bf16.mxu0 0
      %375 = vmatpush1.bf16.msra.mxu0 0
      %376 = vmatprep.subr.bf16.mxu0 0
      %377 = vmatpush1.bf16.msra.mxu0 0
      %378 = vmatprep.subr.bf16.mxu0 0
      %379 = vmatpush1.bf16.msra.mxu0 0
      %380 = vmatprep.subr.bf16.mxu0 0
      %381 = vmatpush1.bf16.msra.mxu0 0
      %382 = vmatprep.subr.bf16.mxu0 0
      %383 = vmatpush1.bf16.msra.mxu0 0
      %384 = vmatprep.subr.bf16.mxu0 0
      %385 = vmatpush1.bf16.msra.mxu0 0
      %386 = vmatprep.subr.bf16.mxu0 0
      %387 = vmatpush1.bf16.msra.mxu0 0
      %388 = vmatprep.subr.bf16.mxu0 0
      %389 = vmatpush1.bf16.msra.mxu0 0
      %390 = vmatprep.mubr.bf16.mxu0 0
      %391 = vmatmul.mubr.bf16.gmra.mrb[0].mxu0 %v356
      %v392 = vpop.f32.mrb[0].mxu0
      %v393 = vadd.f32 %v294, %v392
      %v394 = vpop.f32.mrb[0].mxu0
      %v395 = vpop.f32.mrb[0].mxu0
      %v396 = vpop.f32.mrb[0].mxu0
      %397 = vdwg.mxu0
      %398 = vst.msk [vmem:[#allocation2 + $0x9] sm:$0xff] %vm348, %v393
      %399 = vst.msk [vmem:[#allocation2 + $0x10] sm:$0x2] %vm350, %v285
      %v400 = vld [vmem:[#allocation2] sm:$0xff]
      %v401 = vld [vmem:[#allocation2 + $0x8] sm:$0xff]
      %v402 = vld [vmem:[#allocation2 + $0x10] sm:$0x3]
      %v403 = vpack.c.bf16 %v401, %v400
      %v404 = vpack.c.bf16 %v402, %v402
      %v405 = vld [vmem:[%s3] sm:$0xf]
      %v406 = vld [vmem:[%s3 + $0x4] sm:$0xf]
      %v407 = vld [vmem:[%s3 + $0x8] sm:$0xf]
      %v408 = vld [vmem:[%s3 + $0xc] sm:$0xf]
      %v413 = vunpack.c.l.b16 %v405
      %v414 = vunpack.c.l.b16 %v406
      %v415 = vunpack.c.l.b16 %v407
      %v416 = vunpack.c.l.b16 %v408
      %v417 = vpack.c.b16 %v414, %v413
      %v418 = vpack.c.b16 %v416, %v415
      %v422 = vsel %vm348, %v403, 0
      %v425 = vsel %vm348, %v404, 0
      %427 = vmatprep.subr.bf16.mxu0 0
      %428 = vmatpush1.bf16.msra.mxu0 %v417
      %429 = vmatprep.subr.bf16.mxu0 0
      %430 = vmatpush1.bf16.msra.mxu0 %v418
      %431 = vmatprep.subr.bf16.mxu0 0
      %432 = vmatpush1.bf16.msra.mxu0 0
      %433 = vmatprep.subr.bf16.mxu0 0
      %434 = vmatpush1.bf16.msra.mxu0 0
      %435 = vmatprep.subr.bf16.mxu0 0
      %436 = vmatpush1.bf16.msra.mxu0 0
      %437 = vmatprep.subr.bf16.mxu0 0
      %438 = vmatpush1.bf16.msra.mxu0 0
      %439 = vmatprep.subr.bf16.mxu0 0
      %440 = vmatpush1.bf16.msra.mxu0 0
      %441 = vmatprep.subr.bf16.mxu0 0
      %442 = vmatpush1.bf16.msra.mxu0 0
      %443 = vmatprep.subr.bf16.mxu0 0
      %444 = vmatpush1.bf16.msra.mxu0 0
      %445 = vmatprep.subr.bf16.mxu0 0
      %446 = vmatpush1.bf16.msra.mxu0 0
      %447 = vmatprep.subr.bf16.mxu0 0
      %448 = vmatpush1.bf16.msra.mxu0 0
      %449 = vmatprep.subr.bf16.mxu0 0
      %450 = vmatpush1.bf16.msra.mxu0 0
      %451 = vmatprep.subr.bf16.mxu0 0
      %452 = vmatpush1.bf16.msra.mxu0 0
      %453 = vmatprep.subr.bf16.mxu0 0
      %454 = vmatpush1.bf16.msra.mxu0 0
      %455 = vmatprep.subr.bf16.mxu0 0
      %456 = vmatpush1.bf16.msra.mxu0 0
      %457 = vmatprep.subr.bf16.mxu0 0
      %458 = vmatpush1.bf16.msra.mxu0 0
      %459 = vmatprep.mubr.bf16.mxu0 0
      %460 = vmatmul.mubr.bf16.gmra.mrb[0].mxu0 %v422
      %v461 = vpop.f32.mrb[0].mxu0
      %v462 = vadd.f32 0.0, %v461
      %v463 = vpop.f32.mrb[0].mxu0
      %v464 = vpop.f32.mrb[0].mxu0
      %v465 = vadd.f32 0.0, %v464
      %v466 = vpop.f32.mrb[0].mxu0
      %467 = vmatprep.mubr.bf16.mxu0 0
      %468 = vmatmul.mubr.bf16.gmra.mrb[0].mxu0 %v425
      %v469 = vpop.f32.mrb[0].mxu0
      %v470 = vadd.f32 0.0, %v469
      %v471 = vpop.f32.mrb[0].mxu0
      %v472 = vpop.f32.mrb[0].mxu0
      %v473 = vpop.f32.mrb[0].mxu0
      %474 = vdwg.mxu0
      %v475 = vld [vmem:[%s4] sm:$0xf]
      %v476 = vld [vmem:[%s4 + $0x4] sm:$0xf]
      %v477 = vld [vmem:[%s4 + $0x8] sm:$0xf]
      %v478 = vld [vmem:[%s4 + $0xc] sm:$0xf]
      %v483 = vunpack.c.l.b16 %v475
      %v484 = vunpack.c.l.b16 %v476
      %v485 = vunpack.c.l.b16 %v477
      %v486 = vunpack.c.l.b16 %v478
      %v487 = vpack.c.b16 %v484, %v483
      %v488 = vpack.c.b16 %v486, %v485
      %491 = vmatprep.subr.bf16.mxu0 0
      %492 = vmatpush1.bf16.msra.mxu0 %v487
      %493 = vmatprep.subr.bf16.mxu0 0
      %494 = vmatpush1.bf16.msra.mxu0 %v488
      %495 = vmatprep.subr.bf16.mxu0 0
      %496 = vmatpush1.bf16.msra.mxu0 0
      %497 = vmatprep.subr.bf16.mxu0 0
      %498 = vmatpush1.bf16.msra.mxu0 0
      %499 = vmatprep.subr.bf16.mxu0 0
      %500 = vmatpush1.bf16.msra.mxu0 0
      %501 = vmatprep.subr.bf16.mxu0 0
      %502 = vmatpush1.bf16.msra.mxu0 0
      %503 = vmatprep.subr.bf16.mxu0 0
      %504 = vmatpush1.bf16.msra.mxu0 0
      %505 = vmatprep.subr.bf16.mxu0 0
      %506 = vmatpush1.bf16.msra.mxu0 0
      %507 = vmatprep.subr.bf16.mxu0 0
      %508 = vmatpush1.bf16.msra.mxu0 0
      %509 = vmatprep.subr.bf16.mxu0 0
      %510 = vmatpush1.bf16.msra.mxu0 0
      %511 = vmatprep.subr.bf16.mxu0 0
      %512 = vmatpush1.bf16.msra.mxu0 0
      %513 = vmatprep.subr.bf16.mxu0 0
      %514 = vmatpush1.bf16.msra.mxu0 0
      %515 = vmatprep.subr.bf16.mxu0 0
      %516 = vmatpush1.bf16.msra.mxu0 0
      %517 = vmatprep.subr.bf16.mxu0 0
      %518 = vmatpush1.bf16.msra.mxu0 0
      %519 = vmatprep.subr.bf16.mxu0 0
      %520 = vmatpush1.bf16.msra.mxu0 0
      %521 = vmatprep.subr.bf16.mxu0 0
      %522 = vmatpush1.bf16.msra.mxu0 0
      %523 = vmatprep.mubr.bf16.mxu0 0
      %524 = vmatmul.mubr.bf16.gmra.mrb[0].mxu0 %v422
      %v525 = vpop.f32.mrb[0].mxu0
      %v526 = vadd.f32 0.0, %v525
      %v527 = vpop.f32.mrb[0].mxu0
      %v528 = vpop.f32.mrb[0].mxu0
      %v529 = vadd.f32 0.0, %v528
      %v530 = vpop.f32.mrb[0].mxu0
      %531 = vmatprep.mubr.bf16.mxu0 0
      %532 = vmatmul.mubr.bf16.gmra.mrb[0].mxu0 %v425
      %v533 = vpop.f32.mrb[0].mxu0
      %v534 = vadd.f32 0.0, %v533
      %v535 = vpop.f32.mrb[0].mxu0
      %v536 = vpop.f32.mrb[0].mxu0
      %v537 = vpop.f32.mrb[0].mxu0
      %538 = vdwg.mxu0
      %v539 = vlaneseq
      %v540 = vshrl.u32 %v539, 7
      %v541 = vadd.s32 %v540, 8
      %v542 = vadd.s32 %v540, 16
      %vm543 = vcmp.ge.s32.totalorder %v540, 9
      %vm544 = vcmp.ge.s32.totalorder %v541, 9
      %vm545 = vcmp.ge.s32.totalorder %v542, 9
      %v546 = vsel %vm543, 1, 0
      %v547 = vsel %vm544, 1, 0
      %v548 = vsel %vm545, 1, 0
      %v549 = vmul.u32 %v546, 9
      %v550 = vmul.u32 %v547, 9
      %v551 = vmul.u32 %v548, 9
      %v552 = vsub.s32 %v540, %v549
      %v553 = vsub.s32 %v541, %v550
      %v554 = vsub.s32 %v542, %v551
      %555 = vst [vmem:[#allocation3] sm:$0x7] 0.0
      %556 = vst [vmem:[#allocation3 + $0x3] sm:$0xff] %v526
      %557 = vst [vmem:[#allocation3 + $0xb] sm:$0xff] %v529
      %558 = vst [vmem:[#allocation3 + $0x13] sm:$0x3] %v534
      %v559 = vld [vmem:[%s5 + $0x3] sm:$0x1]
      %v560 = vld [vmem:[#allocation3 + $0x3] sm:$0xff]
      %v561 = vld [vmem:[#allocation3 + $0xb] sm:$0xff]
      %v562 = vld [vmem:[#allocation3 + $0x13] sm:$0x3]
      %v563 = vlaneseq
      %v564 = vshrl.u32 %v563, 7
      %v565 = vsub.s32 0, %v564
      %v566 = vrot.slane %v559, %v565
      %v567 = vmul.f32 %v560, %v566
      %v568 = vmul.f32 %v561, %v566
      %v569 = vmul.f32 %v562, %v566
      %v570 = vlaneseq
      %v571 = vshrl.u32 %v570, 7
      %v572 = vsub.s32 2, %v571
      %v573 = vrot.slane %v285, %v572
      %v574 = vadd.f32 %v573, %v567
      %v575 = vadd.f32 %v573, %v568
      %v576 = vadd.f32 %v573, %v569
      %v577 = vld [vmem:[%s5 + $0x2] sm:$0x1]
      %v578 = vld [vmem:[#allocation3 + $0x2] sm:$0xff]
      %v579 = vld [vmem:[#allocation3 + $0xa] sm:$0xff]
      %v580 = vld [vmem:[#allocation3 + $0x12] sm:$0x3]
      %v581 = vlaneseq
      %v582 = vshrl.u32 %v581, 7
      %v583 = vsub.s32 0, %v582
      %v584 = vrot.slane %v577, %v583
      %v585 = vmul.f32 %v578, %v584
      %v586 = vmul.f32 %v579, %v584
      %v587 = vmul.f32 %v580, %v584
      %vm588 = vcmp.ge.s32.totalorder %v552, 1
      %vm589 = vcmp.ge.s32.totalorder %v553, 1
      %vm590 = vcmp.ge.s32.totalorder %v554, 1
      %v591 = vsel %vm588, 1, 0
      %v592 = vsel %vm589, 1, 0
      %v593 = vsel %vm590, 1, 0
      %v594 = vcvt.s32.f32 %v591
      %v595 = vcvt.s32.f32 %v592
      %v596 = vcvt.s32.f32 %v593
      %v597 = vmul.f32 %v585, %v594
      %v598 = vmul.f32 %v586, %v595
      %v599 = vmul.f32 %v587, %v596
      %v600 = vadd.f32 %v574, %v597
      %v601 = vadd.f32 %v575, %v598
      %v602 = vadd.f32 %v576, %v599
      %v603 = vld [vmem:[%s5 + $0x1] sm:$0x1]
      %v604 = vld [vmem:[#allocation3 + $0x1] sm:$0xff]
      %v605 = vld [vmem:[#allocation3 + $0x9] sm:$0xff]
      %v606 = vld [vmem:[#allocation3 + $0x11] sm:$0x3]
      %v607 = vlaneseq
      %v608 = vshrl.u32 %v607, 7
      %v609 = vsub.s32 0, %v608
      %v610 = vrot.slane %v603, %v609
      %v611 = vmul.f32 %v604, %v610
      %v612 = vmul.f32 %v605, %v610
      %v613 = vmul.f32 %v606, %v610
      %vm614 = vcmp.ge.s32.totalorder %v552, 2
      %vm615 = vcmp.ge.s32.totalorder %v553, 2
      %vm616 = vcmp.ge.s32.totalorder %v554, 2
      %v617 = vsel %vm614, 1, 0
      %v618 = vsel %vm615, 1, 0
      %v619 = vsel %vm616, 1, 0
      %v620 = vcvt.s32.f32 %v617
      %v621 = vcvt.s32.f32 %v618
      %v622 = vcvt.s32.f32 %v619
      %v623 = vmul.f32 %v611, %v620
      %v624 = vmul.f32 %v612, %v621
      %v625 = vmul.f32 %v613, %v622
      %v626 = vadd.f32 %v600, %v623
      %v627 = vadd.f32 %v601, %v624
      %v628 = vadd.f32 %v602, %v625
      %v629 = vld [vmem:[%s5] sm:$0x1]
      %v630 = vld [vmem:[#allocation3] sm:$0xff]
      %v631 = vld [vmem:[#allocation3 + $0x8] sm:$0xff]
      %v632 = vld [vmem:[#allocation3 + $0x10] sm:$0x3]
      %v633 = vlaneseq
      %v634 = vshrl.u32 %v633, 7
      %v635 = vsub.s32 0, %v634
      %v636 = vrot.slane %v629, %v635
      %v637 = vmul.f32 %v630, %v636
      %v638 = vmul.f32 %v631, %v636
      %v639 = vmul.f32 %v632, %v636
      %vm640 = vcmp.ge.s32.totalorder %v552, 3
      %vm641 = vcmp.ge.s32.totalorder %v553, 3
      %vm642 = vcmp.ge.s32.totalorder %v554, 3
      %v643 = vsel %vm640, 1, 0
      %v644 = vsel %vm641, 1, 0
      %v645 = vsel %vm642, 1, 0
      %v646 = vcvt.s32.f32 %v643
      %v647 = vcvt.s32.f32 %v644
      %v648 = vcvt.s32.f32 %v645
      %v649 = vmul.f32 %v637, %v646
      %v650 = vmul.f32 %v638, %v647
      %v651 = vmul.f32 %v639, %v648
      %v652 = vadd.f32 %v626, %v649
      %v653 = vadd.f32 %v627, %v650
      %v654 = vadd.f32 %v628, %v651
      %v655 = vsub.f32 0.0, %v652
      %v656 = vsub.f32 0.0, %v653
      %v657 = vsub.f32 0.0, %v654
      %v658 = vmul.f32 %v655, 1.442695
      %v659 = vpow.pop %v658
      %v660 = vmul.f32 %v656, 1.442695
      %v661 = vpow.pop %v660
      %v662 = vmul.f32 %v657, 1.442695
      %v663 = vpow.pop %v662
      %v664 = vadd.f32 %v659, 1.0
      %v665 = vadd.f32 %v661, 1.0
      %v666 = vadd.f32 %v663, 1.0
      %v667 = vrcp.pop %v664
      %v668 = vmul.f32 1.0, %v667
      %v669 = vrcp.pop %v665
      %v670 = vmul.f32 1.0, %v669
      %v671 = vrcp.pop %v666
      %v672 = vmul.f32 1.0, %v671
      %v673 = vmul.f32 %v652, %v668
      %v674 = vmul.f32 %v653, %v670
      %v675 = vmul.f32 %v654, %v672
      %v676 = vlaneseq
      %v677 = vshrl.u32 %v676, 7
      %v678 = vsub.s32 3, %v677
      %v679 = vrot.slane %v285, %v678
      %681 = vrot.lane.b32.xlu0 %v679, 64
      %v682 = vpop.permute.xlu0 %681
      %v684 = vadd.f32 %v462, %v682
      %v685 = vadd.f32 %v465, %v682
      %v686 = vadd.f32 %v470, %v682
      %v687 = vmax.f32 %v684, 0.0
      %v688 = vmax.f32 %v685, 0.0
      %v689 = vmax.f32 %v686, 0.0
      %v690 = vand.u32 2147483647, %v684
      %v691 = vand.u32 2147483647, %v685
      %v692 = vand.u32 2147483647, %v686
      %v693 = vsub.f32 0.0, %v690
      %v694 = vsub.f32 0.0, %v691
      %v695 = vsub.f32 0.0, %v692
      %v696 = vmul.f32 %v693, 1.442695
      %v697 = vpow.pop %v696
      %v698 = vmul.f32 %v694, 1.442695
      %v699 = vpow.pop %v698
      %v700 = vmul.f32 %v695, 1.442695
      %v701 = vpow.pop %v700
      %v702 = vadd.f32 %v697, 1.0
      %v703 = vadd.f32 %v699, 1.0
      %v704 = vadd.f32 %v701, 1.0
      %v705 = vlog2.pop %v702
      %v706 = vmul.f32 %v705, 0.6931472
      %v707 = vlog2.pop %v703
      %v708 = vmul.f32 %v707, 0.6931472
      %v709 = vlog2.pop %v704
      %v710 = vmul.f32 %v709, 0.6931472
      %v711 = vadd.f32 %v687, %v706
      %v712 = vadd.f32 %v688, %v708
      %v713 = vadd.f32 %v689, %v710
      %v714 = vlaneseq
      %v715 = vand.u32 %v714, 127
      %vm716 = vcmp.le.s32.totalorder %v715, %v540
      %vm717 = vcmp.le.s32.totalorder %v715, %v541
      %vm718 = vcmp.le.s32.totalorder %v715, %v542
      %v719 = vsub.s32 %v540, %v552
      %v720 = vsub.s32 %v541, %v553
      %v721 = vsub.s32 %v542, %v554
      %vm722 = vcmp.ge.s32.totalorder %v715, %v719
      %vm723 = vcmp.ge.s32.totalorder %v715, %v720
      %vm724 = vcmp.ge.s32.totalorder %v715, %v721
      %vm725 = vmand %vm716, %vm722
      %vm726 = vmand %vm717, %vm723
      %vm727 = vmand %vm718, %vm724
      %v728 = vsel %vm725, 1, 0
      %v729 = vsel %vm726, 1, 0
      %v730 = vsel %vm727, 1, 0
      %v731 = vcvt.s32.f32 %v728
      %v732 = vcvt.s32.f32 %v729
      %v733 = vcvt.s32.f32 %v730
      %vm734 = vcmp.eq.s32.totalorder %v540, %v715
      %vm735 = vcmp.eq.s32.totalorder %v541, %v715
      %vm736 = vcmp.eq.s32.totalorder %v542, %v715
      %v737 = vsel %vm734, 1, 0
      %v738 = vsel %vm735, 1, 0
      %v739 = vsel %vm736, 1, 0
      %v740 = vcvt.s32.f32 %v737
      %v741 = vcvt.s32.f32 %v738
      %v742 = vcvt.s32.f32 %v739
      %746 = vrot.lane.b32.xlu0 %v711, 64
      %v747 = vpop.permute.xlu0 %746
      %748 = vrot.lane.b32.xlu0 %v712, 64
      %v749 = vpop.permute.xlu0 %748
      %750 = vrot.lane.b32.xlu0 %v713, 64
      %v751 = vpop.permute.xlu0 %750
      %vm754 = vcmask 146432
      %v756 = vsel %vm754, %v731, 0
      %v759 = vsel %vm754, %v732, 0
      %v762 = vsel %vm754, %v733, 0
      %vm764 = vcmask 1041408
      %v765 = vsel %vm764, %v751, 0
      %767 = vmatprep.subr.mxu0 0.0
      %768 = vmatpush1.msra.mxu0 %v747
      %769 = vmatprep.subr.mxu0 0.0
      %770 = vmatpush1.msra.mxu0 %v749
      %771 = vmatprep.subr.mxu0 0.0
      %772 = vmatpush1.msra.mxu0 %v765
      %773 = vmatprep.subr.mxu0 0.0
      %774 = vmatpush1.msra.mxu0 0.0
      %775 = vmatprep.subr.mxu0 0.0
      %776 = vmatpush1.msra.mxu0 0.0
      %777 = vmatprep.subr.mxu0 0.0
      %778 = vmatpush1.msra.mxu0 0.0
      %779 = vmatprep.subr.mxu0 0.0
      %780 = vmatpush1.msra.mxu0 0.0
      %781 = vmatprep.subr.mxu0 0.0
      %782 = vmatpush1.msra.mxu0 0.0
      %783 = vmatprep.subr.mxu0 0.0
      %784 = vmatpush1.msra.mxu0 0.0
      %785 = vmatprep.subr.mxu0 0.0
      %786 = vmatpush1.msra.mxu0 0.0
      %787 = vmatprep.subr.mxu0 0.0
      %788 = vmatpush1.msra.mxu0 0.0
      %789 = vmatprep.subr.mxu0 0.0
      %790 = vmatpush1.msra.mxu0 0.0
      %791 = vmatprep.subr.mxu0 0.0
      %792 = vmatpush1.msra.mxu0 0.0
      %793 = vmatprep.subr.mxu0 0.0
      %794 = vmatpush1.msra.mxu0 0.0
      %795 = vmatprep.subr.mxu0 0.0
      %796 = vmatpush1.msra.mxu0 0.0
      %797 = vmatprep.subr.mxu0 0.0
      %798 = vmatpush1.msra.mxu0 0.0
      %799 = vmatprep.subr.mxu0 0.0
      %800 = vmatpush1.msra.mxu0 0.0
      %801 = vmatprep.subr.mxu0 0.0
      %802 = vmatpush1.msra.mxu0 0.0
      %803 = vmatprep.subr.mxu0 0.0
      %804 = vmatpush1.msra.mxu0 0.0
      %805 = vmatprep.subr.mxu0 0.0
      %806 = vmatpush1.msra.mxu0 0.0
      %807 = vmatprep.subr.mxu0 0.0
      %808 = vmatpush1.msra.mxu0 0.0
      %809 = vmatprep.subr.mxu0 0.0
      %810 = vmatpush1.msra.mxu0 0.0
      %811 = vmatprep.subr.mxu0 0.0
      %812 = vmatpush1.msra.mxu0 0.0
      %813 = vmatprep.subr.mxu0 0.0
      %814 = vmatpush1.msra.mxu0 0.0
      %815 = vmatprep.subr.mxu0 0.0
      %816 = vmatpush1.msra.mxu0 0.0
      %817 = vmatprep.subr.mxu0 0.0
      %818 = vmatpush1.msra.mxu0 0.0
      %819 = vmatprep.subr.mxu0 0.0
      %820 = vmatpush1.msra.mxu0 0.0
      %821 = vmatprep.subr.mxu0 0.0
      %822 = vmatpush1.msra.mxu0 0.0
      %823 = vmatprep.subr.mxu0 0.0
      %824 = vmatpush1.msra.mxu0 0.0
      %825 = vmatprep.subr.mxu0 0.0
      %826 = vmatpush1.msra.mxu0 0.0
      %827 = vmatprep.subr.mxu0 0.0
      %828 = vmatpush1.msra.mxu0 0.0
      %829 = vmatprep.subr.mxu0 0.0
      %830 = vmatpush1.msra.mxu0 0.0
      %831 = vmatprep.mubr.f32.mxu0 0.0
      %832 = vmatmul.mubr.f32.gmra.mrb[0].mxu0 %v756
      %v833 = vpop.f32.mrb[0].mxu0
      %v834 = vadd.f32 0.0, %v833
      %v835 = vpop.f32.mrb[0].mxu0
      %836 = vmatprep.mubr.f32.mxu0 0.0
      %837 = vmatmul.mubr.f32.gmra.mrb[0].mxu0 %v759
      %v838 = vpop.f32.mrb[0].mxu0
      %v839 = vadd.f32 0.0, %v838
      %v840 = vpop.f32.mrb[0].mxu0
      %841 = vmatprep.mubr.f32.mxu0 0.0
      %842 = vmatmul.mubr.f32.gmra.mrb[0].mxu0 %v762
      %v843 = vpop.f32.mrb[0].mxu0
      %v844 = vadd.f32 0.0, %v843
      %v845 = vpop.f32.mrb[0].mxu0
      %846 = vdwg.mxu0
      %v847 = vlaneseq
      %v848 = vshrl.u32 %v847, 7
      %v849 = vsub.s32 4, %v848
      %v850 = vrot.slane %v285, %v849
      %v851 = vmul.f32 %v834, %v850
      %v852 = vmul.f32 %v839, %v850
      %v853 = vmul.f32 %v844, %v850
      %v854 = vpack.c.bf16 %v674, %v673
      %v855 = vpack.c.bf16 %v675, %v675
      %858 = vrot.lane.b32.xlu0 %v854, 32
      %v859 = vpop.permute.xlu0 %858
      %860 = vrot.lane.b32.xlu0 %v855, 32
      %v861 = vpop.permute.xlu0 %860
      %862 = vrot.lane.b32.xlu0 %v854, 64
      %v863 = vpop.permute.xlu0 %862
      %864 = vrot.lane.b32.xlu0 %v855, 64
      %v865 = vpop.permute.xlu0 %864
      %v867 = vsel %vm348, %v859, 0
      %v870 = vsel %vm348, %v861, 0
      %v873 = vsel %vm348, %v863, 0
      %v876 = vsel %vm348, %v865, 0
      %878 = vmatprep.subr.bf16.mxu0 0
      %879 = vmatpush1.bf16.xpose.msra.mxu0 %v873
      %880 = vmatprep.subr.bf16.mxu0 0
      %881 = vmatpush1.bf16.xpose.msra.mxu0 %v876
      %882 = vmatprep.subr.bf16.mxu0 0
      %883 = vmatpush1.bf16.xpose.msra.mxu0 0
      %884 = vmatprep.subr.bf16.mxu0 0
      %885 = vmatpush1.bf16.xpose.msra.mxu0 0
      %886 = vmatprep.subr.bf16.mxu0 0
      %887 = vmatpush1.bf16.xpose.msra.mxu0 0
      %888 = vmatprep.subr.bf16.mxu0 0
      %889 = vmatpush1.bf16.xpose.msra.mxu0 0
      %890 = vmatprep.subr.bf16.mxu0 0
      %891 = vmatpush1.bf16.xpose.msra.mxu0 0
      %892 = vmatprep.subr.bf16.mxu0 0
      %893 = vmatpush1.bf16.xpose.msra.mxu0 0
      %894 = vmatprep.subr.bf16.mxu0 0
      %895 = vmatpush1.bf16.xpose.msra.mxu0 0
      %896 = vmatprep.subr.bf16.mxu0 0
      %897 = vmatpush1.bf16.xpose.msra.mxu0 0
      %898 = vmatprep.subr.bf16.mxu0 0
      %899 = vmatpush1.bf16.xpose.msra.mxu0 0
      %900 = vmatprep.subr.bf16.mxu0 0
      %901 = vmatpush1.bf16.xpose.msra.mxu0 0
      %902 = vmatprep.subr.bf16.mxu0 0
      %903 = vmatpush1.bf16.xpose.msra.mxu0 0
      %904 = vmatprep.subr.bf16.mxu0 0
      %905 = vmatpush1.bf16.xpose.msra.mxu0 0
      %906 = vmatprep.subr.bf16.mxu0 0
      %907 = vmatpush1.bf16.xpose.msra.mxu0 0
      %908 = vmatprep.subr.bf16.mxu0 0
      %909 = vmatpush1.bf16.xpose.msra.mxu0 0
      %910 = vmatprep.mubr.bf16.mxu0 0
      %911 = vmatmul.mubr.bf16.gmra.mrb[0].mxu0 %v867
      %v912 = vpop.f32.mrb[0].mxu0
      %v913 = vadd.f32 0.0, %v912
      %v914 = vpop.f32.mrb[0].mxu0
      %v915 = vpop.f32.mrb[0].mxu0
      %v916 = vadd.f32 0.0, %v915
      %v917 = vpop.f32.mrb[0].mxu0
      %918 = vmatprep.mubr.bf16.mxu0 0
      %919 = vmatmul.mubr.bf16.gmra.mrb[0].mxu0 %v870
      %v920 = vpop.f32.mrb[0].mxu0
      %v921 = vadd.f32 0.0, %v920
      %v922 = vpop.f32.mrb[0].mxu0
      %v923 = vpop.f32.mrb[0].mxu0
      %v924 = vpop.f32.mrb[0].mxu0
      %925 = vdwg.mxu0
      %927 = vset.pattern.permute.xlu0 0
      %928 = vperm.xlu0 %927, %v851
      %v929 = vpop.permute.xlu0 %928
      %932 = vset.pattern.permute.xlu0 0
      %933 = vperm.xlu0 %932, %v852
      %v934 = vpop.permute.xlu0 %933
      %937 = vset.pattern.permute.xlu0 0
      %938 = vperm.xlu0 %937, %v853
      %v939 = vpop.permute.xlu0 %938
      %v941 = vmul.f32 %v740, %v929
      %v942 = vmul.f32 %v741, %v934
      %v943 = vmul.f32 %v742, %v939
      %v944 = vsel %vm754, %v941, 0.0
      %v945 = vsel %vm754, %v942, 0.0
      %v946 = vadd.f32 %v944, %v945
      %vm947 = vcmask 140288
      %v948 = vsel %vm947, %v943, 0.0
      %v949 = vadd.f32 %v946, %v948
      %v950 = vrot.slane %v949, 4
      %v951 = vadd.f32 %v949, %v950
      %v952 = vrot.slane %v951, 2
      %v953 = vadd.f32 %v951, %v952
      %v954 = vrot.slane %v953, 1
      %v955 = vadd.f32 %v953, %v954
      %v956 = vsub.f32 %v929, %v955
      %v957 = vsub.f32 %v934, %v955
      %v958 = vsub.f32 %v939, %v955
      %v959 = vsel %vm725, %v956, -1e+30
      %v960 = vsel %vm726, %v957, -1e+30
      %v961 = vsel %vm727, %v958, -1e+30
      %v962 = vmul.f32 %v959, 1.442695
      %v963 = vpow.pop %v962
      %v964 = vmul.f32 %v960, 1.442695
      %v965 = vpow.pop %v964
      %v966 = vmul.f32 %v961, 1.442695
      %v967 = vpow.pop %v966
      %v968 = vmul.f32 %v913, %v963
      %v969 = vmul.f32 %v916, %v965
      %v970 = vmul.f32 %v921, %v967
      %v971 = vpack.c.bf16 %v969, %v968
      %v972 = vpack.c.bf16 %v970, %v970
      %973 = vset.pattern.permute.xlu0 64
      %974 = vperm.xlu0 %973, %v711
      %v975 = vpop.permute.xlu0 %974
      %977 = vset.pattern.permute.xlu0 64
      %978 = vperm.xlu0 %977, %v712
      %v979 = vpop.permute.xlu0 %978
      %981 = vset.pattern.permute.xlu0 64
      %982 = vperm.xlu0 %981, %v713
      %v983 = vpop.permute.xlu0 %982
      %v985 = vmul.f32 %v673, %v975
      %v986 = vmul.f32 %v674, %v979
      %v987 = vmul.f32 %v675, %v983
      %v988 = vpack.c.bf16 %v986, %v985
      %v989 = vpack.c.bf16 %v987, %v987
      %v991 = vsel %vm754, %v971, 0
      %v994 = vsel %vm754, %v972, 0
      %vm996 = vcmask 1040384
      %v998 = vsel %vm996, %v989, 0
      %1000 = vmatprep.subr.bf16.mxu0 0
      %1001 = vmatpush1.bf16.msra.mxu0 %v988
      %1002 = vmatprep.subr.bf16.mxu0 0
      %1003 = vmatpush1.bf16.msra.mxu0 %v998
      %1004 = vmatprep.subr.bf16.mxu0 0
      %1005 = vmatpush1.bf16.msra.mxu0 0
      %1006 = vmatprep.subr.bf16.mxu0 0
      %1007 = vmatpush1.bf16.msra.mxu0 0
      %1008 = vmatprep.subr.bf16.mxu0 0
      %1009 = vmatpush1.bf16.msra.mxu0 0
      %1010 = vmatprep.subr.bf16.mxu0 0
      %1011 = vmatpush1.bf16.msra.mxu0 0
      %1012 = vmatprep.subr.bf16.mxu0 0
      %1013 = vmatpush1.bf16.msra.mxu0 0
      %1014 = vmatprep.subr.bf16.mxu0 0
      %1015 = vmatpush1.bf16.msra.mxu0 0
      %1016 = vmatprep.subr.bf16.mxu0 0
      %1017 = vmatpush1.bf16.msra.mxu0 0
      %1018 = vmatprep.subr.bf16.mxu0 0
      %1019 = vmatpush1.bf16.msra.mxu0 0
      %1020 = vmatprep.subr.bf16.mxu0 0
      %1021 = vmatpush1.bf16.msra.mxu0 0
      %1022 = vmatprep.subr.bf16.mxu0 0
      %1023 = vmatpush1.bf16.msra.mxu0 0
      %1024 = vmatprep.subr.bf16.mxu0 0
      %1025 = vmatpush1.bf16.msra.mxu0 0
      %1026 = vmatprep.subr.bf16.mxu0 0
      %1027 = vmatpush1.bf16.msra.mxu0 0
      %1028 = vmatprep.subr.bf16.mxu0 0
      %1029 = vmatpush1.bf16.msra.mxu0 0
      %1030 = vmatprep.subr.bf16.mxu0 0
      %1031 = vmatpush1.bf16.msra.mxu0 0
      %1032 = vmatprep.mubr.bf16.mxu0 0
      %1033 = vmatmul.mubr.bf16.gmra.mrb[0].mxu0 %v991
      %v1034 = vpop.f32.mrb[0].mxu0
      %v1035 = vadd.f32 0.0, %v1034
      %v1036 = vpop.f32.mrb[0].mxu0
      %v1037 = vpop.f32.mrb[0].mxu0
      %v1038 = vadd.f32 0.0, %v1037
      %v1039 = vpop.f32.mrb[0].mxu0
      %1040 = vmatprep.mubr.bf16.mxu0 0
      %1041 = vmatmul.mubr.bf16.gmra.mrb[0].mxu0 %v994
      %v1042 = vpop.f32.mrb[0].mxu0
      %v1043 = vadd.f32 0.0, %v1042
      %v1044 = vpop.f32.mrb[0].mxu0
      %v1045 = vpop.f32.mrb[0].mxu0
      %v1046 = vpop.f32.mrb[0].mxu0
      %1047 = vdwg.mxu0
      %1048 = vset.pattern.permute.xlu0 1
      %1049 = vperm.xlu0 %1048, %v851
      %v1050 = vpop.permute.xlu0 %1049
      %1052 = vset.pattern.permute.xlu0 1
      %1053 = vperm.xlu0 %1052, %v852
      %v1054 = vpop.permute.xlu0 %1053
      %1056 = vset.pattern.permute.xlu0 1
      %1057 = vperm.xlu0 %1056, %v853
      %v1058 = vpop.permute.xlu0 %1057
      %v1060 = vmul.f32 %v740, %v1050
      %v1061 = vmul.f32 %v741, %v1054
      %v1062 = vmul.f32 %v742, %v1058
      %v1063 = vsel %vm754, %v1060, 0.0
      %v1064 = vsel %vm754, %v1061, 0.0
      %v1065 = vadd.f32 %v1063, %v1064
      %v1066 = vsel %vm947, %v1062, 0.0
      %v1067 = vadd.f32 %v1065, %v1066
      %v1068 = vrot.slane %v1067, 4
      %v1069 = vadd.f32 %v1067, %v1068
      %v1070 = vrot.slane %v1069, 2
      %v1071 = vadd.f32 %v1069, %v1070
      %v1072 = vrot.slane %v1071, 1
      %v1073 = vadd.f32 %v1071, %v1072
      %v1074 = vsub.f32 %v1050, %v1073
      %v1075 = vsub.f32 %v1054, %v1073
      %v1076 = vsub.f32 %v1058, %v1073
      %v1077 = vsel %vm725, %v1074, -1e+30
      %v1078 = vsel %vm726, %v1075, -1e+30
      %v1079 = vsel %vm727, %v1076, -1e+30
      %v1080 = vmul.f32 %v1077, 1.442695
      %v1081 = vpow.pop %v1080
      %v1082 = vmul.f32 %v1078, 1.442695
      %v1083 = vpow.pop %v1082
      %v1084 = vmul.f32 %v1079, 1.442695
      %v1085 = vpow.pop %v1084
      %v1086 = vmul.f32 %v913, %v1081
      %v1087 = vmul.f32 %v916, %v1083
      %v1088 = vmul.f32 %v921, %v1085
      %v1089 = vpack.c.bf16 %v1087, %v1086
      %v1090 = vpack.c.bf16 %v1088, %v1088
      %1091 = vset.pattern.permute.xlu0 65
      %1092 = vperm.xlu0 %1091, %v711
      %v1093 = vpop.permute.xlu0 %1092
      %1095 = vset.pattern.permute.xlu0 65
      %1096 = vperm.xlu0 %1095, %v712
      %v1097 = vpop.permute.xlu0 %1096
      %1099 = vset.pattern.permute.xlu0 65
      %1100 = vperm.xlu0 %1099, %v713
      %v1101 = vpop.permute.xlu0 %1100
      %v1103 = vmul.f32 %v673, %v1093
      %v1104 = vmul.f32 %v674, %v1097
      %v1105 = vmul.f32 %v675, %v1101
      %v1106 = vpack.c.bf16 %v1104, %v1103
      %v1107 = vpack.c.bf16 %v1105, %v1105
      %1110 = vrot.lane.b32.xlu0 %v1106, 120
      %v1111 = vpop.permute.xlu0 %1110
      %1112 = vrot.lane.b32.xlu0 %v1107, 120
      %v1113 = vpop.permute.xlu0 %1112
      %v1116 = vsel %vm754, %v1089, 0
      %v1119 = vsel %vm754, %v1090, 0
      %v1122 = vsel %vm996, %v1113, 0
      %1124 = vmatprep.subr.bf16.mxu0 0
      %1125 = vmatpush1.bf16.msra.mxu0 %v1111
      %1126 = vmatprep.subr.bf16.mxu0 0
      %1127 = vmatpush1.bf16.msra.mxu0 %v1122
      %1128 = vmatprep.subr.bf16.mxu0 0
      %1129 = vmatpush1.bf16.msra.mxu0 0
      %1130 = vmatprep.subr.bf16.mxu0 0
      %1131 = vmatpush1.bf16.msra.mxu0 0
      %1132 = vmatprep.subr.bf16.mxu0 0
      %1133 = vmatpush1.bf16.msra.mxu0 0
      %1134 = vmatprep.subr.bf16.mxu0 0
      %1135 = vmatpush1.bf16.msra.mxu0 0
      %1136 = vmatprep.subr.bf16.mxu0 0
      %1137 = vmatpush1.bf16.msra.mxu0 0
      %1138 = vmatprep.subr.bf16.mxu0 0
      %1139 = vmatpush1.bf16.msra.mxu0 0
      %1140 = vmatprep.subr.bf16.mxu0 0
      %1141 = vmatpush1.bf16.msra.mxu0 0
      %1142 = vmatprep.subr.bf16.mxu0 0
      %1143 = vmatpush1.bf16.msra.mxu0 0
      %1144 = vmatprep.subr.bf16.mxu0 0
      %1145 = vmatpush1.bf16.msra.mxu0 0
      %1146 = vmatprep.subr.bf16.mxu0 0
      %1147 = vmatpush1.bf16.msra.mxu0 0
      %1148 = vmatprep.subr.bf16.mxu0 0
      %1149 = vmatpush1.bf16.msra.mxu0 0
      %1150 = vmatprep.subr.bf16.mxu0 0
      %1151 = vmatpush1.bf16.msra.mxu0 0
      %1152 = vmatprep.subr.bf16.mxu0 0
      %1153 = vmatpush1.bf16.msra.mxu0 0
      %1154 = vmatprep.subr.bf16.mxu0 0
      %1155 = vmatpush1.bf16.msra.mxu0 0
      %1156 = vmatprep.mubr.bf16.mxu0 0
      %1157 = vmatmul.mubr.bf16.gmra.mrb[0].mxu0 %v1116
      %v1158 = vpop.f32.mrb[0].mxu0
      %v1159 = vadd.f32 0.0, %v1158
      %v1160 = vpop.f32.mrb[0].mxu0
      %v1161 = vpop.f32.mrb[0].mxu0
      %v1162 = vadd.f32 0.0, %v1161
      %v1163 = vpop.f32.mrb[0].mxu0
      %1164 = vmatprep.mubr.bf16.mxu0 0
      %1165 = vmatmul.mubr.bf16.gmra.mrb[0].mxu0 %v1119
      %v1166 = vpop.f32.mrb[0].mxu0
      %v1167 = vadd.f32 0.0, %v1166
      %v1168 = vpop.f32.mrb[0].mxu0
      %v1169 = vpop.f32.mrb[0].mxu0
      %v1170 = vpop.f32.mrb[0].mxu0
      %1171 = vdwg.mxu0
      %1172 = vset.pattern.permute.xlu0 2
      %1173 = vperm.xlu0 %1172, %v851
      %v1174 = vpop.permute.xlu0 %1173
      %1176 = vset.pattern.permute.xlu0 2
      %1177 = vperm.xlu0 %1176, %v852
      %v1178 = vpop.permute.xlu0 %1177
      %1180 = vset.pattern.permute.xlu0 2
      %1181 = vperm.xlu0 %1180, %v853
      %v1182 = vpop.permute.xlu0 %1181
      %v1184 = vmul.f32 %v740, %v1174
      %v1185 = vmul.f32 %v741, %v1178
      %v1186 = vmul.f32 %v742, %v1182
      %v1187 = vsel %vm754, %v1184, 0.0
      %v1188 = vsel %vm754, %v1185, 0.0
      %v1189 = vadd.f32 %v1187, %v1188
      %v1190 = vsel %vm947, %v1186, 0.0
      %v1191 = vadd.f32 %v1189, %v1190
      %v1192 = vrot.slane %v1191, 4
      %v1193 = vadd.f32 %v1191, %v1192
      %v1194 = vrot.slane %v1193, 2
      %v1195 = vadd.f32 %v1193, %v1194
      %v1196 = vrot.slane %v1195, 1
      %v1197 = vadd.f32 %v1195, %v1196
      %v1198 = vsub.f32 %v1174, %v1197
      %v1199 = vsub.f32 %v1178, %v1197
      %v1200 = vsub.f32 %v1182, %v1197
      %v1201 = vsel %vm725, %v1198, -1e+30
      %v1202 = vsel %vm726, %v1199, -1e+30
      %v1203 = vsel %vm727, %v1200, -1e+30
      %v1204 = vmul.f32 %v1201, 1.442695
      %v1205 = vpow.pop %v1204
      %v1206 = vmul.f32 %v1202, 1.442695
      %v1207 = vpow.pop %v1206
      %v1208 = vmul.f32 %v1203, 1.442695
      %v1209 = vpow.pop %v1208
      %v1210 = vmul.f32 %v913, %v1205
      %v1211 = vmul.f32 %v916, %v1207
      %v1212 = vmul.f32 %v921, %v1209
      %v1213 = vpack.c.bf16 %v1211, %v1210
      %v1214 = vpack.c.bf16 %v1212, %v1212
      %1215 = vset.pattern.permute.xlu0 66
      %1216 = vperm.xlu0 %1215, %v711
      %v1217 = vpop.permute.xlu0 %1216
      %1219 = vset.pattern.permute.xlu0 66
      %1220 = vperm.xlu0 %1219, %v712
      %v1221 = vpop.permute.xlu0 %1220
      %1223 = vset.pattern.permute.xlu0 66
      %1224 = vperm.xlu0 %1223, %v713
      %v1225 = vpop.permute.xlu0 %1224
      %v1227 = vmul.f32 %v673, %v1217
      %v1228 = vmul.f32 %v674, %v1221
      %v1229 = vmul.f32 %v675, %v1225
      %v1230 = vpack.c.bf16 %v1228, %v1227
      %v1231 = vpack.c.bf16 %v1229, %v1229
      %1234 = vrot.lane.b32.xlu0 %v1230, 112
      %v1235 = vpop.permute.xlu0 %1234
      %1236 = vrot.lane.b32.xlu0 %v1231, 112
      %v1237 = vpop.permute.xlu0 %1236
      %v1240 = vsel %vm754, %v1213, 0
      %v1243 = vsel %vm754, %v1214, 0
      %v1246 = vsel %vm996, %v1237, 0
      %1248 = vmatprep.subr.bf16.mxu0 0
      %1249 = vmatpush1.bf16.msra.mxu0 %v1235
      %1250 = vmatprep.subr.bf16.mxu0 0
      %1251 = vmatpush1.bf16.msra.mxu0 %v1246
      %1252 = vmatprep.subr.bf16.mxu0 0
      %1253 = vmatpush1.bf16.msra.mxu0 0
      %1254 = vmatprep.subr.bf16.mxu0 0
      %1255 = vmatpush1.bf16.msra.mxu0 0
      %1256 = vmatprep.subr.bf16.mxu0 0
      %1257 = vmatpush1.bf16.msra.mxu0 0
      %1258 = vmatprep.subr.bf16.mxu0 0
      %1259 = vmatpush1.bf16.msra.mxu0 0
      %1260 = vmatprep.subr.bf16.mxu0 0
      %1261 = vmatpush1.bf16.msra.mxu0 0
      %1262 = vmatprep.subr.bf16.mxu0 0
      %1263 = vmatpush1.bf16.msra.mxu0 0
      %1264 = vmatprep.subr.bf16.mxu0 0
      %1265 = vmatpush1.bf16.msra.mxu0 0
      %1266 = vmatprep.subr.bf16.mxu0 0
      %1267 = vmatpush1.bf16.msra.mxu0 0
      %1268 = vmatprep.subr.bf16.mxu0 0
      %1269 = vmatpush1.bf16.msra.mxu0 0
      %1270 = vmatprep.subr.bf16.mxu0 0
      %1271 = vmatpush1.bf16.msra.mxu0 0
      %1272 = vmatprep.subr.bf16.mxu0 0
      %1273 = vmatpush1.bf16.msra.mxu0 0
      %1274 = vmatprep.subr.bf16.mxu0 0
      %1275 = vmatpush1.bf16.msra.mxu0 0
      %1276 = vmatprep.subr.bf16.mxu0 0
      %1277 = vmatpush1.bf16.msra.mxu0 0
      %1278 = vmatprep.subr.bf16.mxu0 0
      %1279 = vmatpush1.bf16.msra.mxu0 0
      %1280 = vmatprep.mubr.bf16.mxu0 0
      %1281 = vmatmul.mubr.bf16.gmra.mrb[0].mxu0 %v1240
      %v1282 = vpop.f32.mrb[0].mxu0
      %v1283 = vadd.f32 0.0, %v1282
      %v1284 = vpop.f32.mrb[0].mxu0
      %v1285 = vpop.f32.mrb[0].mxu0
      %v1286 = vadd.f32 0.0, %v1285
      %v1287 = vpop.f32.mrb[0].mxu0
      %1288 = vmatprep.mubr.bf16.mxu0 0
      %1289 = vmatmul.mubr.bf16.gmra.mrb[0].mxu0 %v1243
      %v1290 = vpop.f32.mrb[0].mxu0
      %v1291 = vadd.f32 0.0, %v1290
      %v1292 = vpop.f32.mrb[0].mxu0
      %v1293 = vpop.f32.mrb[0].mxu0
      %v1294 = vpop.f32.mrb[0].mxu0
      %1295 = vdwg.mxu0
      %1296 = vset.pattern.permute.xlu0 3
      %1297 = vperm.xlu0 %1296, %v851
      %v1298 = vpop.permute.xlu0 %1297
      %1300 = vset.pattern.permute.xlu0 3
      %1301 = vperm.xlu0 %1300, %v852
      %v1302 = vpop.permute.xlu0 %1301
      %1304 = vset.pattern.permute.xlu0 3
      %1305 = vperm.xlu0 %1304, %v853
      %v1306 = vpop.permute.xlu0 %1305
      %v1308 = vmul.f32 %v740, %v1298
      %v1309 = vmul.f32 %v741, %v1302
      %v1310 = vmul.f32 %v742, %v1306
      %v1311 = vsel %vm754, %v1308, 0.0
      %v1312 = vsel %vm754, %v1309, 0.0
      %v1313 = vadd.f32 %v1311, %v1312
      %v1314 = vsel %vm947, %v1310, 0.0
      %v1315 = vadd.f32 %v1313, %v1314
      %v1316 = vrot.slane %v1315, 4
      %v1317 = vadd.f32 %v1315, %v1316
      %v1318 = vrot.slane %v1317, 2
      %v1319 = vadd.f32 %v1317, %v1318
      %v1320 = vrot.slane %v1319, 1
      %v1321 = vadd.f32 %v1319, %v1320
      %v1322 = vsub.f32 %v1298, %v1321
      %v1323 = vsub.f32 %v1302, %v1321
      %v1324 = vsub.f32 %v1306, %v1321
      %v1325 = vsel %vm725, %v1322, -1e+30
      %v1326 = vsel %vm726, %v1323, -1e+30
      %v1327 = vsel %vm727, %v1324, -1e+30
      %v1328 = vmul.f32 %v1325, 1.442695
      %v1329 = vpow.pop %v1328
      %v1330 = vmul.f32 %v1326, 1.442695
      %v1331 = vpow.pop %v1330
      %v1332 = vmul.f32 %v1327, 1.442695
      %v1333 = vpow.pop %v1332
      %v1334 = vmul.f32 %v913, %v1329
      %v1335 = vmul.f32 %v916, %v1331
      %v1336 = vmul.f32 %v921, %v1333
      %v1337 = vpack.c.bf16 %v1335, %v1334
      %v1338 = vpack.c.bf16 %v1336, %v1336
      %1339 = vset.pattern.permute.xlu0 67
      %1340 = vperm.xlu0 %1339, %v711
      %v1341 = vpop.permute.xlu0 %1340
      %1343 = vset.pattern.permute.xlu0 67
      %1344 = vperm.xlu0 %1343, %v712
      %v1345 = vpop.permute.xlu0 %1344
      %1347 = vset.pattern.permute.xlu0 67
      %1348 = vperm.xlu0 %1347, %v713
      %v1349 = vpop.permute.xlu0 %1348
      %v1351 = vmul.f32 %v673, %v1341
      %v1352 = vmul.f32 %v674, %v1345
      %v1353 = vmul.f32 %v675, %v1349
      %v1354 = vpack.c.bf16 %v1352, %v1351
      %v1355 = vpack.c.bf16 %v1353, %v1353
      %1358 = vrot.lane.b32.xlu0 %v1354, 104
      %v1359 = vpop.permute.xlu0 %1358
      %1360 = vrot.lane.b32.xlu0 %v1355, 104
      %v1361 = vpop.permute.xlu0 %1360
      %v1364 = vsel %vm754, %v1337, 0
      %v1367 = vsel %vm754, %v1338, 0
      %v1370 = vsel %vm996, %v1361, 0
      %1372 = vmatprep.subr.bf16.mxu0 0
      %1373 = vmatpush1.bf16.msra.mxu0 %v1359
      %1374 = vmatprep.subr.bf16.mxu0 0
      %1375 = vmatpush1.bf16.msra.mxu0 %v1370
      %1376 = vmatprep.subr.bf16.mxu0 0
      %1377 = vmatpush1.bf16.msra.mxu0 0
      %1378 = vmatprep.subr.bf16.mxu0 0
      %1379 = vmatpush1.bf16.msra.mxu0 0
      %1380 = vmatprep.subr.bf16.mxu0 0
      %1381 = vmatpush1.bf16.msra.mxu0 0
      %1382 = vmatprep.subr.bf16.mxu0 0
      %1383 = vmatpush1.bf16.msra.mxu0 0
      %1384 = vmatprep.subr.bf16.mxu0 0
      %1385 = vmatpush1.bf16.msra.mxu0 0
      %1386 = vmatprep.subr.bf16.mxu0 0
      %1387 = vmatpush1.bf16.msra.mxu0 0
      %1388 = vmatprep.subr.bf16.mxu0 0
      %1389 = vmatpush1.bf16.msra.mxu0 0
      %1390 = vmatprep.subr.bf16.mxu0 0
      %1391 = vmatpush1.bf16.msra.mxu0 0
      %1392 = vmatprep.subr.bf16.mxu0 0
      %1393 = vmatpush1.bf16.msra.mxu0 0
      %1394 = vmatprep.subr.bf16.mxu0 0
      %1395 = vmatpush1.bf16.msra.mxu0 0
      %1396 = vmatprep.subr.bf16.mxu0 0
      %1397 = vmatpush1.bf16.msra.mxu0 0
      %1398 = vmatprep.subr.bf16.mxu0 0
      %1399 = vmatpush1.bf16.msra.mxu0 0
      %1400 = vmatprep.subr.bf16.mxu0 0
      %1401 = vmatpush1.bf16.msra.mxu0 0
      %1402 = vmatprep.subr.bf16.mxu0 0
      %1403 = vmatpush1.bf16.msra.mxu0 0
      %1404 = vmatprep.mubr.bf16.mxu0 0
      %1405 = vmatmul.mubr.bf16.gmra.mrb[0].mxu0 %v1364
      %v1406 = vpop.f32.mrb[0].mxu0
      %v1407 = vadd.f32 0.0, %v1406
      %v1408 = vpop.f32.mrb[0].mxu0
      %v1409 = vpop.f32.mrb[0].mxu0
      %v1410 = vadd.f32 0.0, %v1409
      %v1411 = vpop.f32.mrb[0].mxu0
      %1412 = vmatprep.mubr.bf16.mxu0 0
      %1413 = vmatmul.mubr.bf16.gmra.mrb[0].mxu0 %v1367
      %v1414 = vpop.f32.mrb[0].mxu0
      %v1415 = vadd.f32 0.0, %v1414
      %v1416 = vpop.f32.mrb[0].mxu0
      %v1417 = vpop.f32.mrb[0].mxu0
      %v1418 = vpop.f32.mrb[0].mxu0
      %1419 = vdwg.mxu0
      %1420 = vset.pattern.permute.xlu0 4
      %1421 = vperm.xlu0 %1420, %v851
      %v1422 = vpop.permute.xlu0 %1421
      %1424 = vset.pattern.permute.xlu0 4
      %1425 = vperm.xlu0 %1424, %v852
      %v1426 = vpop.permute.xlu0 %1425
      %1428 = vset.pattern.permute.xlu0 4
      %1429 = vperm.xlu0 %1428, %v853
      %v1430 = vpop.permute.xlu0 %1429
      %v1432 = vmul.f32 %v740, %v1422
      %v1433 = vmul.f32 %v741, %v1426
      %v1434 = vmul.f32 %v742, %v1430
      %v1435 = vsel %vm754, %v1432, 0.0
      %v1436 = vsel %vm754, %v1433, 0.0
      %v1437 = vadd.f32 %v1435, %v1436
      %v1438 = vsel %vm947, %v1434, 0.0
      %v1439 = vadd.f32 %v1437, %v1438
      %v1440 = vrot.slane %v1439, 4
      %v1441 = vadd.f32 %v1439, %v1440
      %v1442 = vrot.slane %v1441, 2
      %v1443 = vadd.f32 %v1441, %v1442
      %v1444 = vrot.slane %v1443, 1
      %v1445 = vadd.f32 %v1443, %v1444
      %v1446 = vsub.f32 %v1422, %v1445
      %v1447 = vsub.f32 %v1426, %v1445
      %v1448 = vsub.f32 %v1430, %v1445
      %v1449 = vsel %vm725, %v1446, -1e+30
      %v1450 = vsel %vm726, %v1447, -1e+30
      %v1451 = vsel %vm727, %v1448, -1e+30
      %v1452 = vmul.f32 %v1449, 1.442695
      %v1453 = vpow.pop %v1452
      %v1454 = vmul.f32 %v1450, 1.442695
      %v1455 = vpow.pop %v1454
      %v1456 = vmul.f32 %v1451, 1.442695
      %v1457 = vpow.pop %v1456
      %v1458 = vmul.f32 %v913, %v1453
      %v1459 = vmul.f32 %v916, %v1455
      %v1460 = vmul.f32 %v921, %v1457
      %v1461 = vpack.c.bf16 %v1459, %v1458
      %v1462 = vpack.c.bf16 %v1460, %v1460
      %1463 = vset.pattern.permute.xlu0 68
      %1464 = vperm.xlu0 %1463, %v711
      %v1465 = vpop.permute.xlu0 %1464
      %1467 = vset.pattern.permute.xlu0 68
      %1468 = vperm.xlu0 %1467, %v712
      %v1469 = vpop.permute.xlu0 %1468
      %1471 = vset.pattern.permute.xlu0 68
      %1472 = vperm.xlu0 %1471, %v713
      %v1473 = vpop.permute.xlu0 %1472
      %v1475 = vmul.f32 %v673, %v1465
      %v1476 = vmul.f32 %v674, %v1469
      %v1477 = vmul.f32 %v675, %v1473
      %v1478 = vpack.c.bf16 %v1476, %v1475
      %v1479 = vpack.c.bf16 %v1477, %v1477
      %1482 = vrot.lane.b32.xlu0 %v1478, 96
      %v1483 = vpop.permute.xlu0 %1482
      %1484 = vrot.lane.b32.xlu0 %v1479, 96
      %v1485 = vpop.permute.xlu0 %1484
      %v1488 = vsel %vm754, %v1461, 0
      %v1491 = vsel %vm754, %v1462, 0
      %v1494 = vsel %vm996, %v1485, 0
      %1496 = vmatprep.subr.bf16.mxu0 0
      %1497 = vmatpush1.bf16.msra.mxu0 %v1483
      %1498 = vmatprep.subr.bf16.mxu0 0
      %1499 = vmatpush1.bf16.msra.mxu0 %v1494
      %1500 = vmatprep.subr.bf16.mxu0 0
      %1501 = vmatpush1.bf16.msra.mxu0 0
      %1502 = vmatprep.subr.bf16.mxu0 0
      %1503 = vmatpush1.bf16.msra.mxu0 0
      %1504 = vmatprep.subr.bf16.mxu0 0
      %1505 = vmatpush1.bf16.msra.mxu0 0
      %1506 = vmatprep.subr.bf16.mxu0 0
      %1507 = vmatpush1.bf16.msra.mxu0 0
      %1508 = vmatprep.subr.bf16.mxu0 0
      %1509 = vmatpush1.bf16.msra.mxu0 0
      %1510 = vmatprep.subr.bf16.mxu0 0
      %1511 = vmatpush1.bf16.msra.mxu0 0
      %1512 = vmatprep.subr.bf16.mxu0 0
      %1513 = vmatpush1.bf16.msra.mxu0 0
      %1514 = vmatprep.subr.bf16.mxu0 0
      %1515 = vmatpush1.bf16.msra.mxu0 0
      %1516 = vmatprep.subr.bf16.mxu0 0
      %1517 = vmatpush1.bf16.msra.mxu0 0
      %1518 = vmatprep.subr.bf16.mxu0 0
      %1519 = vmatpush1.bf16.msra.mxu0 0
      %1520 = vmatprep.subr.bf16.mxu0 0
      %1521 = vmatpush1.bf16.msra.mxu0 0
      %1522 = vmatprep.subr.bf16.mxu0 0
      %1523 = vmatpush1.bf16.msra.mxu0 0
      %1524 = vmatprep.subr.bf16.mxu0 0
      %1525 = vmatpush1.bf16.msra.mxu0 0
      %1526 = vmatprep.subr.bf16.mxu0 0
      %1527 = vmatpush1.bf16.msra.mxu0 0
      %1528 = vmatprep.mubr.bf16.mxu0 0
      %1529 = vmatmul.mubr.bf16.gmra.mrb[0].mxu0 %v1488
      %v1530 = vpop.f32.mrb[0].mxu0
      %v1531 = vadd.f32 0.0, %v1530
      %v1532 = vpop.f32.mrb[0].mxu0
      %v1533 = vpop.f32.mrb[0].mxu0
      %v1534 = vadd.f32 0.0, %v1533
      %v1535 = vpop.f32.mrb[0].mxu0
      %1536 = vmatprep.mubr.bf16.mxu0 0
      %1537 = vmatmul.mubr.bf16.gmra.mrb[0].mxu0 %v1491
      %v1538 = vpop.f32.mrb[0].mxu0
      %v1539 = vadd.f32 0.0, %v1538
      %v1540 = vpop.f32.mrb[0].mxu0
      %v1541 = vpop.f32.mrb[0].mxu0
      %v1542 = vpop.f32.mrb[0].mxu0
      %1543 = vdwg.mxu0
      %1544 = vset.pattern.permute.xlu0 5
      %1545 = vperm.xlu0 %1544, %v851
      %v1546 = vpop.permute.xlu0 %1545
      %1548 = vset.pattern.permute.xlu0 5
      %1549 = vperm.xlu0 %1548, %v852
      %v1550 = vpop.permute.xlu0 %1549
      %1552 = vset.pattern.permute.xlu0 5
      %1553 = vperm.xlu0 %1552, %v853
      %v1554 = vpop.permute.xlu0 %1553
      %v1556 = vmul.f32 %v740, %v1546
      %v1557 = vmul.f32 %v741, %v1550
      %v1558 = vmul.f32 %v742, %v1554
      %v1559 = vsel %vm754, %v1556, 0.0
      %v1560 = vsel %vm754, %v1557, 0.0
      %v1561 = vadd.f32 %v1559, %v1560
      %v1562 = vsel %vm947, %v1558, 0.0
      %v1563 = vadd.f32 %v1561, %v1562
      %v1564 = vrot.slane %v1563, 4
      %v1565 = vadd.f32 %v1563, %v1564
      %v1566 = vrot.slane %v1565, 2
      %v1567 = vadd.f32 %v1565, %v1566
      %v1568 = vrot.slane %v1567, 1
      %v1569 = vadd.f32 %v1567, %v1568
      %v1570 = vsub.f32 %v1546, %v1569
      %v1571 = vsub.f32 %v1550, %v1569
      %v1572 = vsub.f32 %v1554, %v1569
      %v1573 = vsel %vm725, %v1570, -1e+30
      %v1574 = vsel %vm726, %v1571, -1e+30
      %v1575 = vsel %vm727, %v1572, -1e+30
      %v1576 = vmul.f32 %v1573, 1.442695
      %v1577 = vpow.pop %v1576
      %v1578 = vmul.f32 %v1574, 1.442695
      %v1579 = vpow.pop %v1578
      %v1580 = vmul.f32 %v1575, 1.442695
      %v1581 = vpow.pop %v1580
      %v1582 = vmul.f32 %v913, %v1577
      %v1583 = vmul.f32 %v916, %v1579
      %v1584 = vmul.f32 %v921, %v1581
      %v1585 = vpack.c.bf16 %v1583, %v1582
      %v1586 = vpack.c.bf16 %v1584, %v1584
      %1587 = vset.pattern.permute.xlu0 69
      %1588 = vperm.xlu0 %1587, %v711
      %v1589 = vpop.permute.xlu0 %1588
      %1591 = vset.pattern.permute.xlu0 69
      %1592 = vperm.xlu0 %1591, %v712
      %v1593 = vpop.permute.xlu0 %1592
      %1595 = vset.pattern.permute.xlu0 69
      %1596 = vperm.xlu0 %1595, %v713
      %v1597 = vpop.permute.xlu0 %1596
      %v1599 = vmul.f32 %v673, %v1589
      %v1600 = vmul.f32 %v674, %v1593
      %v1601 = vmul.f32 %v675, %v1597
      %v1602 = vpack.c.bf16 %v1600, %v1599
      %v1603 = vpack.c.bf16 %v1601, %v1601
      %1606 = vrot.lane.b32.xlu0 %v1602, 88
      %v1607 = vpop.permute.xlu0 %1606
      %1608 = vrot.lane.b32.xlu0 %v1603, 88
      %v1609 = vpop.permute.xlu0 %1608
      %v1612 = vsel %vm754, %v1585, 0
      %v1615 = vsel %vm754, %v1586, 0
      %v1618 = vsel %vm996, %v1609, 0
      %1620 = vmatprep.subr.bf16.mxu0 0
      %1621 = vmatpush1.bf16.msra.mxu0 %v1607
      %1622 = vmatprep.subr.bf16.mxu0 0
      %1623 = vmatpush1.bf16.msra.mxu0 %v1618
      %1624 = vmatprep.subr.bf16.mxu0 0
      %1625 = vmatpush1.bf16.msra.mxu0 0
      %1626 = vmatprep.subr.bf16.mxu0 0
      %1627 = vmatpush1.bf16.msra.mxu0 0
      %1628 = vmatprep.subr.bf16.mxu0 0
      %1629 = vmatpush1.bf16.msra.mxu0 0
      %1630 = vmatprep.subr.bf16.mxu0 0
      %1631 = vmatpush1.bf16.msra.mxu0 0
      %1632 = vmatprep.subr.bf16.mxu0 0
      %1633 = vmatpush1.bf16.msra.mxu0 0
      %1634 = vmatprep.subr.bf16.mxu0 0
      %1635 = vmatpush1.bf16.msra.mxu0 0
      %1636 = vmatprep.subr.bf16.mxu0 0
      %1637 = vmatpush1.bf16.msra.mxu0 0
      %1638 = vmatprep.subr.bf16.mxu0 0
      %1639 = vmatpush1.bf16.msra.mxu0 0
      %1640 = vmatprep.subr.bf16.mxu0 0
      %1641 = vmatpush1.bf16.msra.mxu0 0
      %1642 = vmatprep.subr.bf16.mxu0 0
      %1643 = vmatpush1.bf16.msra.mxu0 0
      %1644 = vmatprep.subr.bf16.mxu0 0
      %1645 = vmatpush1.bf16.msra.mxu0 0
      %1646 = vmatprep.subr.bf16.mxu0 0
      %1647 = vmatpush1.bf16.msra.mxu0 0
      %1648 = vmatprep.subr.bf16.mxu0 0
      %1649 = vmatpush1.bf16.msra.mxu0 0
      %1650 = vmatprep.subr.bf16.mxu0 0
      %1651 = vmatpush1.bf16.msra.mxu0 0
      %1652 = vmatprep.mubr.bf16.mxu0 0
      %1653 = vmatmul.mubr.bf16.gmra.mrb[0].mxu0 %v1612
      %v1654 = vpop.f32.mrb[0].mxu0
      %v1655 = vadd.f32 0.0, %v1654
      %v1656 = vpop.f32.mrb[0].mxu0
      %v1657 = vpop.f32.mrb[0].mxu0
      %v1658 = vadd.f32 0.0, %v1657
      %v1659 = vpop.f32.mrb[0].mxu0
      %1660 = vmatprep.mubr.bf16.mxu0 0
      %1661 = vmatmul.mubr.bf16.gmra.mrb[0].mxu0 %v1615
      %v1662 = vpop.f32.mrb[0].mxu0
      %v1663 = vadd.f32 0.0, %v1662
      %v1664 = vpop.f32.mrb[0].mxu0
      %v1665 = vpop.f32.mrb[0].mxu0
      %v1666 = vpop.f32.mrb[0].mxu0
      %1667 = vdwg.mxu0
      %1668 = vset.pattern.permute.xlu0 6
      %1669 = vperm.xlu0 %1668, %v851
      %v1670 = vpop.permute.xlu0 %1669
      %1672 = vset.pattern.permute.xlu0 6
      %1673 = vperm.xlu0 %1672, %v852
      %v1674 = vpop.permute.xlu0 %1673
      %1676 = vset.pattern.permute.xlu0 6
      %1677 = vperm.xlu0 %1676, %v853
      %v1678 = vpop.permute.xlu0 %1677
      %v1680 = vmul.f32 %v740, %v1670
      %v1681 = vmul.f32 %v741, %v1674
      %v1682 = vmul.f32 %v742, %v1678
      %v1683 = vsel %vm754, %v1680, 0.0
      %v1684 = vsel %vm754, %v1681, 0.0
      %v1685 = vadd.f32 %v1683, %v1684
      %v1686 = vsel %vm947, %v1682, 0.0
      %v1687 = vadd.f32 %v1685, %v1686
      %v1688 = vrot.slane %v1687, 4
      %v1689 = vadd.f32 %v1687, %v1688
      %v1690 = vrot.slane %v1689, 2
      %v1691 = vadd.f32 %v1689, %v1690
      %v1692 = vrot.slane %v1691, 1
      %v1693 = vadd.f32 %v1691, %v1692
      %v1694 = vsub.f32 %v1670, %v1693
      %v1695 = vsub.f32 %v1674, %v1693
      %v1696 = vsub.f32 %v1678, %v1693
      %v1697 = vsel %vm725, %v1694, -1e+30
      %v1698 = vsel %vm726, %v1695, -1e+30
      %v1699 = vsel %vm727, %v1696, -1e+30
      %v1700 = vmul.f32 %v1697, 1.442695
      %v1701 = vpow.pop %v1700
      %v1702 = vmul.f32 %v1698, 1.442695
      %v1703 = vpow.pop %v1702
      %v1704 = vmul.f32 %v1699, 1.442695
      %v1705 = vpow.pop %v1704
      %v1706 = vmul.f32 %v913, %v1701
      %v1707 = vmul.f32 %v916, %v1703
      %v1708 = vmul.f32 %v921, %v1705
      %v1709 = vpack.c.bf16 %v1707, %v1706
      %v1710 = vpack.c.bf16 %v1708, %v1708
      %1711 = vset.pattern.permute.xlu0 70
      %1712 = vperm.xlu0 %1711, %v711
      %v1713 = vpop.permute.xlu0 %1712
      %1715 = vset.pattern.permute.xlu0 70
      %1716 = vperm.xlu0 %1715, %v712
      %v1717 = vpop.permute.xlu0 %1716
      %1719 = vset.pattern.permute.xlu0 70
      %1720 = vperm.xlu0 %1719, %v713
      %v1721 = vpop.permute.xlu0 %1720
      %v1723 = vmul.f32 %v673, %v1713
      %v1724 = vmul.f32 %v674, %v1717
      %v1725 = vmul.f32 %v675, %v1721
      %v1726 = vpack.c.bf16 %v1724, %v1723
      %v1727 = vpack.c.bf16 %v1725, %v1725
      %1730 = vrot.lane.b32.xlu0 %v1726, 80
      %v1731 = vpop.permute.xlu0 %1730
      %1732 = vrot.lane.b32.xlu0 %v1727, 80
      %v1733 = vpop.permute.xlu0 %1732
      %v1736 = vsel %vm754, %v1709, 0
      %v1739 = vsel %vm754, %v1710, 0
      %v1742 = vsel %vm996, %v1733, 0
      %1744 = vmatprep.subr.bf16.mxu0 0
      %1745 = vmatpush1.bf16.msra.mxu0 %v1731
      %1746 = vmatprep.subr.bf16.mxu0 0
      %1747 = vmatpush1.bf16.msra.mxu0 %v1742
      %1748 = vmatprep.subr.bf16.mxu0 0
      %1749 = vmatpush1.bf16.msra.mxu0 0
      %1750 = vmatprep.subr.bf16.mxu0 0
      %1751 = vmatpush1.bf16.msra.mxu0 0
      %1752 = vmatprep.subr.bf16.mxu0 0
      %1753 = vmatpush1.bf16.msra.mxu0 0
      %1754 = vmatprep.subr.bf16.mxu0 0
      %1755 = vmatpush1.bf16.msra.mxu0 0
      %1756 = vmatprep.subr.bf16.mxu0 0
      %1757 = vmatpush1.bf16.msra.mxu0 0
      %1758 = vmatprep.subr.bf16.mxu0 0
      %1759 = vmatpush1.bf16.msra.mxu0 0
      %1760 = vmatprep.subr.bf16.mxu0 0
      %1761 = vmatpush1.bf16.msra.mxu0 0
      %1762 = vmatprep.subr.bf16.mxu0 0
      %1763 = vmatpush1.bf16.msra.mxu0 0
      %1764 = vmatprep.subr.bf16.mxu0 0
      %1765 = vmatpush1.bf16.msra.mxu0 0
      %1766 = vmatprep.subr.bf16.mxu0 0
      %1767 = vmatpush1.bf16.msra.mxu0 0
      %1768 = vmatprep.subr.bf16.mxu0 0
      %1769 = vmatpush1.bf16.msra.mxu0 0
      %1770 = vmatprep.subr.bf16.mxu0 0
      %1771 = vmatpush1.bf16.msra.mxu0 0
      %1772 = vmatprep.subr.bf16.mxu0 0
      %1773 = vmatpush1.bf16.msra.mxu0 0
      %1774 = vmatprep.subr.bf16.mxu0 0
      %1775 = vmatpush1.bf16.msra.mxu0 0
      %1776 = vmatprep.mubr.bf16.mxu0 0
      %1777 = vmatmul.mubr.bf16.gmra.mrb[0].mxu0 %v1736
      %v1778 = vpop.f32.mrb[0].mxu0
      %v1779 = vadd.f32 0.0, %v1778
      %v1780 = vpop.f32.mrb[0].mxu0
      %v1781 = vpop.f32.mrb[0].mxu0
      %v1782 = vadd.f32 0.0, %v1781
      %v1783 = vpop.f32.mrb[0].mxu0
      %1784 = vmatprep.mubr.bf16.mxu0 0
      %1785 = vmatmul.mubr.bf16.gmra.mrb[0].mxu0 %v1739
      %v1786 = vpop.f32.mrb[0].mxu0
      %v1787 = vadd.f32 0.0, %v1786
      %v1788 = vpop.f32.mrb[0].mxu0
      %v1789 = vpop.f32.mrb[0].mxu0
      %v1790 = vpop.f32.mrb[0].mxu0
      %1791 = vdwg.mxu0
      %1792 = vset.pattern.permute.xlu0 7
      %1793 = vperm.xlu0 %1792, %v851
      %v1794 = vpop.permute.xlu0 %1793
      %1796 = vset.pattern.permute.xlu0 7
      %1797 = vperm.xlu0 %1796, %v852
      %v1798 = vpop.permute.xlu0 %1797
      %1800 = vset.pattern.permute.xlu0 7
      %1801 = vperm.xlu0 %1800, %v853
      %v1802 = vpop.permute.xlu0 %1801
      %v1804 = vmul.f32 %v740, %v1794
      %v1805 = vmul.f32 %v741, %v1798
      %v1806 = vmul.f32 %v742, %v1802
      %v1807 = vsel %vm754, %v1804, 0.0
      %v1808 = vsel %vm754, %v1805, 0.0
      %v1809 = vadd.f32 %v1807, %v1808
      %v1810 = vsel %vm947, %v1806, 0.0
      %v1811 = vadd.f32 %v1809, %v1810
      %v1812 = vrot.slane %v1811, 4
      %v1813 = vadd.f32 %v1811, %v1812
      %v1814 = vrot.slane %v1813, 2
      %v1815 = vadd.f32 %v1813, %v1814
      %v1816 = vrot.slane %v1815, 1
      %v1817 = vadd.f32 %v1815, %v1816
      %v1818 = vsub.f32 %v1794, %v1817
      %v1819 = vsub.f32 %v1798, %v1817
      %v1820 = vsub.f32 %v1802, %v1817
      %v1821 = vsel %vm725, %v1818, -1e+30
      %v1822 = vsel %vm726, %v1819, -1e+30
      %v1823 = vsel %vm727, %v1820, -1e+30
      %v1824 = vmul.f32 %v1821, 1.442695
      %v1825 = vpow.pop %v1824
      %v1826 = vmul.f32 %v1822, 1.442695
      %v1827 = vpow.pop %v1826
      %v1828 = vmul.f32 %v1823, 1.442695
      %v1829 = vpow.pop %v1828
      %v1830 = vmul.f32 %v913, %v1825
      %v1831 = vmul.f32 %v916, %v1827
      %v1832 = vmul.f32 %v921, %v1829
      %v1833 = vpack.c.bf16 %v1831, %v1830
      %v1834 = vpack.c.bf16 %v1832, %v1832
      %1835 = vset.pattern.permute.xlu0 71
      %1836 = vperm.xlu0 %1835, %v711
      %v1837 = vpop.permute.xlu0 %1836
      %1839 = vset.pattern.permute.xlu0 71
      %1840 = vperm.xlu0 %1839, %v712
      %v1841 = vpop.permute.xlu0 %1840
      %1843 = vset.pattern.permute.xlu0 71
      %1844 = vperm.xlu0 %1843, %v713
      %v1845 = vpop.permute.xlu0 %1844
      %v1847 = vmul.f32 %v673, %v1837
      %v1848 = vmul.f32 %v674, %v1841
      %v1849 = vmul.f32 %v675, %v1845
      %v1850 = vpack.c.bf16 %v1848, %v1847
      %v1851 = vpack.c.bf16 %v1849, %v1849
      %1854 = vrot.lane.b32.xlu0 %v1850, 72
      %v1855 = vpop.permute.xlu0 %1854
      %1856 = vrot.lane.b32.xlu0 %v1851, 72
      %v1857 = vpop.permute.xlu0 %1856
      %v1860 = vsel %vm754, %v1833, 0
      %v1863 = vsel %vm754, %v1834, 0
      %v1866 = vsel %vm996, %v1857, 0
      %1868 = vmatprep.subr.bf16.mxu0 0
      %1869 = vmatpush1.bf16.msra.mxu0 %v1855
      %1870 = vmatprep.subr.bf16.mxu0 0
      %1871 = vmatpush1.bf16.msra.mxu0 %v1866
      %1872 = vmatprep.subr.bf16.mxu0 0
      %1873 = vmatpush1.bf16.msra.mxu0 0
      %1874 = vmatprep.subr.bf16.mxu0 0
      %1875 = vmatpush1.bf16.msra.mxu0 0
      %1876 = vmatprep.subr.bf16.mxu0 0
      %1877 = vmatpush1.bf16.msra.mxu0 0
      %1878 = vmatprep.subr.bf16.mxu0 0
      %1879 = vmatpush1.bf16.msra.mxu0 0
      %1880 = vmatprep.subr.bf16.mxu0 0
      %1881 = vmatpush1.bf16.msra.mxu0 0
      %1882 = vmatprep.subr.bf16.mxu0 0
      %1883 = vmatpush1.bf16.msra.mxu0 0
      %1884 = vmatprep.subr.bf16.mxu0 0
      %1885 = vmatpush1.bf16.msra.mxu0 0
      %1886 = vmatprep.subr.bf16.mxu0 0
      %1887 = vmatpush1.bf16.msra.mxu0 0
      %1888 = vmatprep.subr.bf16.mxu0 0
      %1889 = vmatpush1.bf16.msra.mxu0 0
      %1890 = vmatprep.subr.bf16.mxu0 0
      %1891 = vmatpush1.bf16.msra.mxu0 0
      %1892 = vmatprep.subr.bf16.mxu0 0
      %1893 = vmatpush1.bf16.msra.mxu0 0
      %1894 = vmatprep.subr.bf16.mxu0 0
      %1895 = vmatpush1.bf16.msra.mxu0 0
      %1896 = vmatprep.subr.bf16.mxu0 0
      %1897 = vmatpush1.bf16.msra.mxu0 0
      %1898 = vmatprep.subr.bf16.mxu0 0
      %1899 = vmatpush1.bf16.msra.mxu0 0
      %1900 = vmatprep.mubr.bf16.mxu0 0
      %1901 = vmatmul.mubr.bf16.gmra.mrb[0].mxu0 %v1860
      %v1902 = vpop.f32.mrb[0].mxu0
      %v1903 = vadd.f32 0.0, %v1902
      %v1904 = vpop.f32.mrb[0].mxu0
      %v1905 = vpop.f32.mrb[0].mxu0
      %v1906 = vadd.f32 0.0, %v1905
      %v1907 = vpop.f32.mrb[0].mxu0
      %1908 = vmatprep.mubr.bf16.mxu0 0
      %1909 = vmatmul.mubr.bf16.gmra.mrb[0].mxu0 %v1863
      %v1910 = vpop.f32.mrb[0].mxu0
      %v1911 = vadd.f32 0.0, %v1910
      %v1912 = vpop.f32.mrb[0].mxu0
      %v1913 = vpop.f32.mrb[0].mxu0
      %v1914 = vpop.f32.mrb[0].mxu0
      %1915 = vdwg.mxu0
      %1919 = vrot.lane.b32.xlu0 %v1159, 8
      %v1920 = vpop.permute.xlu0 %1919
      %1921 = vrot.lane.b32.xlu0 %v1162, 8
      %v1922 = vpop.permute.xlu0 %1921
      %1923 = vrot.lane.b32.xlu0 %v1167, 8
      %v1924 = vpop.permute.xlu0 %1923
      %1931 = vrot.lane.b32.xlu0 %v1283, 16
      %v1932 = vpop.permute.xlu0 %1931
      %1933 = vrot.lane.b32.xlu0 %v1286, 16
      %v1934 = vpop.permute.xlu0 %1933
      %1935 = vrot.lane.b32.xlu0 %v1291, 16
      %v1936 = vpop.permute.xlu0 %1935
      %1943 = vrot.lane.b32.xlu0 %v1407, 24
      %v1944 = vpop.permute.xlu0 %1943
      %1945 = vrot.lane.b32.xlu0 %v1410, 24
      %v1946 = vpop.permute.xlu0 %1945
      %1947 = vrot.lane.b32.xlu0 %v1415, 24
      %v1948 = vpop.permute.xlu0 %1947
      %1955 = vrot.lane.b32.xlu0 %v1531, 32
      %v1956 = vpop.permute.xlu0 %1955
      %1957 = vrot.lane.b32.xlu0 %v1534, 32
      %v1958 = vpop.permute.xlu0 %1957
      %1959 = vrot.lane.b32.xlu0 %v1539, 32
      %v1960 = vpop.permute.xlu0 %1959
      %1967 = vrot.lane.b32.xlu0 %v1655, 40
      %v1968 = vpop.permute.xlu0 %1967
      %1969 = vrot.lane.b32.xlu0 %v1658, 40
      %v1970 = vpop.permute.xlu0 %1969
      %1971 = vrot.lane.b32.xlu0 %v1663, 40
      %v1972 = vpop.permute.xlu0 %1971
      %1979 = vrot.lane.b32.xlu0 %v1779, 48
      %v1980 = vpop.permute.xlu0 %1979
      %1981 = vrot.lane.b32.xlu0 %v1782, 48
      %v1982 = vpop.permute.xlu0 %1981
      %1983 = vrot.lane.b32.xlu0 %v1787, 48
      %v1984 = vpop.permute.xlu0 %1983
      %1991 = vrot.lane.b32.xlu0 %v1903, 56
      %v1992 = vpop.permute.xlu0 %1991
      %1993 = vrot.lane.b32.xlu0 %v1906, 56
      %v1994 = vpop.permute.xlu0 %1993
      %1995 = vrot.lane.b32.xlu0 %v1911, 56
      %v1996 = vpop.permute.xlu0 %1995
      %vm2000 = vcmask 64512
      %v2001 = vsel %vm2000, %v1035, %v1920
      %v2002 = vsel %vm2000, %v1038, %v1922
      %v2003 = vsel %vm2000, %v1043, %v1924
      %vm2004 = vcmask 130048
      %v2005 = vsel %vm2004, %v2001, %v1932
      %v2006 = vsel %vm2004, %v2002, %v1934
      %v2007 = vsel %vm2004, %v2003, %v1936
      %vm2008 = vcmask 195584
      %v2009 = vsel %vm2008, %v2005, %v1944
      %v2010 = vsel %vm2008, %v2006, %v1946
      %v2011 = vsel %vm2008, %v2007, %v1948
      %v2012 = vsel %vm348, %v2009, %v1956
      %v2013 = vsel %vm348, %v2010, %v1958
      %v2014 = vsel %vm348, %v2011, %v1960
      %vm2015 = vcmask 326656
      %v2016 = vsel %vm2015, %v2012, %v1968
      %v2017 = vsel %vm2015, %v2013, %v1970
      %v2018 = vsel %vm2015, %v2014, %v1972
      %vm2019 = vcmask 392192
      %v2020 = vsel %vm2019, %v2016, %v1980
      %v2021 = vsel %vm2019, %v2017, %v1982
      %v2022 = vsel %vm2019, %v2018, %v1984
      %vm2023 = vcmask 457728
      %v2024 = vsel %vm2023, %v2020, %v1992
      %v2025 = vsel %vm2023, %v2021, %v1994
      %v2026 = vsel %vm2023, %v2022, %v1996
      %v2027 = vlaneseq
      %v2028 = vshrl.u32 %v2027, 7
      %v2029 = vsub.s32 5, %v2028
      %v2030 = vrot.slane %v285, %v2029
      %v2031 = vmul.f32 %v2030, %v673
      %v2032 = vmul.f32 %v2030, %v674
      %v2033 = vmul.f32 %v2030, %v675
      %v2034 = vadd.f32 %v2024, %v2031
      %v2035 = vadd.f32 %v2025, %v2032
      %v2036 = vadd.f32 %v2026, %v2033
      %v2037 = vsub.f32 0.0, %v462
      %v2038 = vsub.f32 0.0, %v465
      %v2039 = vsub.f32 0.0, %v470
      %v2040 = vmul.f32 %v2037, 1.442695
      %v2041 = vpow.pop %v2040
      %v2042 = vmul.f32 %v2038, 1.442695
      %v2043 = vpow.pop %v2042
      %v2044 = vmul.f32 %v2039, 1.442695
      %v2045 = vpow.pop %v2044
      %v2046 = vadd.f32 %v2041, 1.0
      %v2047 = vadd.f32 %v2043, 1.0
      %v2048 = vadd.f32 %v2045, 1.0
      %v2049 = vrcp.pop %v2046
      %v2050 = vmul.f32 1.0, %v2049
      %v2051 = vrcp.pop %v2047
      %v2052 = vmul.f32 1.0, %v2051
      %v2053 = vrcp.pop %v2048
      %v2054 = vmul.f32 1.0, %v2053
      %v2055 = vmul.f32 %v462, %v2050
      %v2056 = vmul.f32 %v465, %v2052
      %v2057 = vmul.f32 %v470, %v2054
      %v2058 = vmul.f32 %v2034, %v2055
      %v2059 = vmul.f32 %v2035, %v2056
      %v2060 = vmul.f32 %v2036, %v2057
      %v2061 = vmul.f32 %v2058, %v2058
      %v2062 = vmul.f32 %v2059, %v2059
      %v2063 = vmul.f32 %v2060, %v2060
      %vm2064 = vcmask 523264
      %v2065 = vsel %vm2064, %v2061, 0.0
      %2066 = vadd.xlane.f32.xlu0 %v2065
      %v2067 = vpop.xlane.xlu0 %2066
      %v2068 = vsel %vm2064, %v2062, 0.0
      %2069 = vadd.xlane.f32.xlu0 %v2068
      %v2070 = vpop.xlane.xlu0 %2069
      %vm2071 = vcmask 517120
      %v2072 = vsel %vm2071, %v2063, 0.0
      %2073 = vadd.xlane.f32.xlu0 %v2072
      %v2074 = vpop.xlane.xlu0 %2073
      %v2075 = vrcp.pop 64.0
      %v2076 = vmul.f32 %v2067, %v2075
      %v2077 = vmul.f32 %v2070, %v2075
      %v2078 = vmul.f32 %v2074, %v2075
      %v2079 = vadd.f32 %v2076, 1e-05
      %v2080 = vadd.f32 %v2077, 1e-05
      %v2081 = vadd.f32 %v2078, 1e-05
      %v2082 = vrsqrt.pop %v2079
      %v2083 = vrsqrt.pop %v2080
      %v2084 = vrsqrt.pop %v2081
      %v2085 = vmul.f32 %v2058, %v2082
      %v2086 = vmul.f32 %v2059, %v2083
      %v2087 = vmul.f32 %v2060, %v2084
      %v2088 = vlaneseq
      %v2089 = vshrl.u32 %v2088, 7
      %v2090 = vsub.s32 6, %v2089
      %v2091 = vrot.slane %v285, %v2090
      %v2092 = vmul.f32 %v2085, %v2091
      %v2093 = vmul.f32 %v2086, %v2091
      %v2094 = vmul.f32 %v2087, %v2091
      %v2095 = vpack.c.bf16 %v2093, %v2092
      %v2096 = vpack.c.bf16 %v2094, %v2094
      %v2097 = vld [vmem:[%s6] sm:$0xf]
      %v2098 = vld [vmem:[%s6 + $0x4] sm:$0xf]
      %v2099 = vld [vmem:[%s6 + $0x8] sm:$0xf]
      %v2100 = vld [vmem:[%s6 + $0xc] sm:$0xf]
      %v2101 = vld [vmem:[%s6 + $0x10] sm:$0xf]
      %v2102 = vld [vmem:[%s6 + $0x14] sm:$0xf]
      %v2103 = vld [vmem:[%s6 + $0x18] sm:$0xf]
      %v2104 = vld [vmem:[%s6 + $0x1c] sm:$0xf]
      %v2113 = vunpack.c.l.b16 %v2097
      %v2114 = vunpack.c.l.b16 %v2098
      %v2115 = vunpack.c.l.b16 %v2099
      %v2116 = vunpack.c.l.b16 %v2100
      %v2117 = vunpack.c.l.b16 %v2101
      %v2118 = vunpack.c.l.b16 %v2102
      %v2119 = vunpack.c.l.b16 %v2103
      %v2120 = vunpack.c.l.b16 %v2104
      %v2121 = vpack.c.b16 %v2114, %v2113
      %v2122 = vpack.c.b16 %v2116, %v2115
      %v2123 = vpack.c.b16 %v2118, %v2117
      %v2124 = vpack.c.b16 %v2120, %v2119
      %v2130 = vsel %vm2064, %v2095, 0
      %v2133 = vsel %vm2064, %v2096, 0
      %2135 = vmatprep.subr.bf16.mxu0 0
      %2136 = vmatpush1.bf16.msra.mxu0 %v2121
      %2137 = vmatprep.subr.bf16.mxu0 0
      %2138 = vmatpush1.bf16.msra.mxu0 %v2122
      %2139 = vmatprep.subr.bf16.mxu0 0
      %2140 = vmatpush1.bf16.msra.mxu0 %v2123
      %2141 = vmatprep.subr.bf16.mxu0 0
      %2142 = vmatpush1.bf16.msra.mxu0 %v2124
      %2143 = vmatprep.subr.bf16.mxu0 0
      %2144 = vmatpush1.bf16.msra.mxu0 0
      %2145 = vmatprep.subr.bf16.mxu0 0
      %2146 = vmatpush1.bf16.msra.mxu0 0
      %2147 = vmatprep.subr.bf16.mxu0 0
      %2148 = vmatpush1.bf16.msra.mxu0 0
      %2149 = vmatprep.subr.bf16.mxu0 0
      %2150 = vmatpush1.bf16.msra.mxu0 0
      %2151 = vmatprep.subr.bf16.mxu0 0
      %2152 = vmatpush1.bf16.msra.mxu0 0
      %2153 = vmatprep.subr.bf16.mxu0 0
      %2154 = vmatpush1.bf16.msra.mxu0 0
      %2155 = vmatprep.subr.bf16.mxu0 0
      %2156 = vmatpush1.bf16.msra.mxu0 0
      %2157 = vmatprep.subr.bf16.mxu0 0
      %2158 = vmatpush1.bf16.msra.mxu0 0
      %2159 = vmatprep.subr.bf16.mxu0 0
      %2160 = vmatpush1.bf16.msra.mxu0 0
      %2161 = vmatprep.subr.bf16.mxu0 0
      %2162 = vmatpush1.bf16.msra.mxu0 0
      %2163 = vmatprep.subr.bf16.mxu0 0
      %2164 = vmatpush1.bf16.msra.mxu0 0
      %2165 = vmatprep.subr.bf16.mxu0 0
      %2166 = vmatpush1.bf16.msra.mxu0 0
      %2167 = vmatprep.mubr.bf16.mxu0 0
      %2168 = vmatmul.mubr.bf16.gmra.mrb[0].mxu0 %v2130
      %v2169 = vpop.f32.mrb[0].mxu0
      %v2170 = vadd.f32 0.0, %v2169
      %v2171 = vpop.f32.mrb[0].mxu0
      %v2172 = vpop.f32.mrb[0].mxu0
      %v2173 = vadd.f32 0.0, %v2172
      %v2174 = vpop.f32.mrb[0].mxu0
      %2175 = vmatprep.mubr.bf16.mxu0 0
      %2176 = vmatmul.mubr.bf16.gmra.mrb[0].mxu0 %v2133
      %v2177 = vpop.f32.mrb[0].mxu0
      %v2178 = vadd.f32 0.0, %v2177
      %v2179 = vpop.f32.mrb[0].mxu0
      %v2180 = vpop.f32.mrb[0].mxu0
      %v2181 = vpop.f32.mrb[0].mxu0
      %2182 = vdwg.mxu0
      %v2183 = vsel %vm348, %v2170, 0.0
      %2184 = vadd.xlane.f32.xlu0 %v2183
      %v2185 = vpop.xlane.xlu0 %2184
      %v2186 = vsel %vm348, %v2173, 0.0
      %2187 = vadd.xlane.f32.xlu0 %v2186
      %v2188 = vpop.xlane.xlu0 %2187
      %vm2189 = vcmask 254976
      %v2190 = vsel %vm2189, %v2178, 0.0
      %2191 = vadd.xlane.f32.xlu0 %v2190
      %v2192 = vpop.xlane.xlu0 %2191
      %v2193 = vrcp.pop 32.0
      %v2194 = vmul.f32 %v2185, %v2193
      %v2195 = vmul.f32 %v2188, %v2193
      %v2196 = vmul.f32 %v2192, %v2193
      %v2197 = vsub.f32 %v2170, %v2194
      %v2198 = vsub.f32 %v2173, %v2195
      %v2199 = vsub.f32 %v2178, %v2196
      %v2200 = vmul.f32 %v2197, %v2197
      %v2201 = vmul.f32 %v2198, %v2198
      %v2202 = vmul.f32 %v2199, %v2199
      %v2203 = vsel %vm348, %v2200, 0.0
      %2204 = vadd.xlane.f32.xlu0 %v2203
      %v2205 = vpop.xlane.xlu0 %2204
      %v2206 = vsel %vm348, %v2201, 0.0
      %2207 = vadd.xlane.f32.xlu0 %v2206
      %v2208 = vpop.xlane.xlu0 %2207
      %v2209 = vsel %vm2189, %v2202, 0.0
      %2210 = vadd.xlane.f32.xlu0 %v2209
      %v2211 = vpop.xlane.xlu0 %2210
      %v2212 = vmul.f32 %v2205, %v2193
      %v2213 = vmul.f32 %v2208, %v2193
      %v2214 = vmul.f32 %v2211, %v2193
      %v2215 = vadd.f32 %v2212, 1e-05
      %v2216 = vadd.f32 %v2213, 1e-05
      %v2217 = vadd.f32 %v2214, 1e-05
      %v2218 = vrsqrt.pop %v2215
      %v2219 = vrsqrt.pop %v2216
      %v2220 = vrsqrt.pop %v2217
      %v2221 = vmul.f32 %v2197, %v2218
      %v2222 = vmul.f32 %v2198, %v2219
      %v2223 = vmul.f32 %v2199, %v2220
      %v2224 = vlaneseq
      %v2225 = vshrl.u32 %v2224, 7
      %v2226 = vsub.s32 7, %v2225
      %v2227 = vrot.slane %v285, %v2226
      %v2228 = vmul.f32 %v2221, %v2227
      %v2229 = vmul.f32 %v2222, %v2227
      %v2230 = vmul.f32 %v2223, %v2227
      %v2231 = vlaneseq
      %v2232 = vshrl.u32 %v2231, 7
      %v2233 = vsub.s32 0, %v2232
      %v2234 = vrot.slane %v286, %v2233
      %v2235 = vadd.f32 %v2228, %v2234
      %v2236 = vadd.f32 %v2229, %v2234
      %v2237 = vadd.f32 %v2230, %v2234
      %2238 = vst.msk [vmem:[%s282] sm:$0xff] %vm348, %v2235
      %vm2239 = vcmask 253952
      %2240 = vst.msk [vmem:[%s282 + $0x8] sm:$0x1] %vm2239, %v2236
      %s2241 = scalar_lea.vmem %s282, 16
      %vm2242 = vcmask 261121
      %2243 = vst.msk [vmem:[%s2241 - $0x1] sm:$0xfe] %vm2242, %v2236
      %2244 = vst.msk [vmem:[%s2241 + $0x7] sm:$0x3] %vm2189, %v2237
      %s2245 = smul.u32 2, %s18
      %p2246 = scmp.lt.s32.totalorder %s2245, 3
      %s2247 = scalar_select %p2246, %s2245, 3
      %s2248 = smul.addr %s2247, 2
      %s2249 = smul.addr %s2248, 8
      %s2250 = scalar_lea.vmem %s7, %s2249
      // Predicated region
      $region49: #{timae_mamba_encoder_forward.1} parent=47 // pred_check
        %p2251 = pneg %p188
      $region50: #{timae_mamba_encoder_forward.1} parent=47 // pred_check_branch
        %2253 = sbr.rel (%p2251) target = $region52
      $region51: #{timae_mamba_encoder_forward.1} parent=47 // pred_region
        %s2254 = smul.u32 2, %s18
      $region52: #{timae_mamba_encoder_forward.1} parent=47 // pred_fallthru
        _
    $region48: #{timae_mamba_encoder_forward.1} parent=5 // pred_fallthru
      _
    %p2255 = scmp.le.s32.totalorder 2, %s13
    // Predicated region
    $region53: #{timae_mamba_encoder_forward.1} parent=5 // pred_check
      %p2256 = pneg %p2255
    $region54: #{timae_mamba_encoder_forward.1} parent=5 // pred_check_branch
      %2258 = sbr.rel (%p2256) target = $region56
    $region55: #{timae_mamba_encoder_forward.1} parent=5 // pred_region
      %s2259 = ssub.s32 %s13, 2
      // Predicated region
      $region57: #{timae_mamba_encoder_forward.1} parent=55 // pred_check
        %p2260 = pneg %p194
      $region58: #{timae_mamba_encoder_forward.1} parent=55 // pred_check_branch
        %2262 = sbr.rel (%p2260) target = $region60
      $region59: #{timae_mamba_encoder_forward.1} parent=55 // pred_region
        %s2263 = smul.u32 2, %s19
        %p2264 = scmp.lt.s32.totalorder %s2263, 3
        %s2265 = scalar_select %p2264, %s2263, 3
        %s2266 = smul.addr %s2265, 2
        %s2267 = smul.addr %s2266, 8
        %s2268 = scalar_lea.vmem %s7, %s2267
      $region60: #{timae_mamba_encoder_forward.1} parent=55 // pred_fallthru
        _
    $region56: #{timae_mamba_encoder_forward.1} parent=5 // pred_fallthru
      _
  $region6: #{timae_mamba_encoder_forward.1} parent=0 // loop_footer
    %s17 = sadd.s32 1, %s13
  $region7: #{timae_mamba_encoder_forward.1} parent=0 // loop_footer_branch
    %12 = sbr.rel target = $region3
  $region8: #{timae_mamba_encoder_forward.1} parent=0 // loop_exit
    _

</llo_original>
